<compile_context>
chip_gen: v7x
topology: tpu7x:2x2x1
jax: 0.10.0
libtpu: 0.0.40
codegen_flags: <defaults>
</compile_context>

<pallas_src>
import jax
import jax.numpy as jnp
import numpy as np
from jax.experimental import pallas as pl
from jax.experimental.pallas import tpu as pltpu

# ---- module hyper-parameters (small, synthetic) -----------------------------
CIN = 4            # input_channels
HID = 32           # hidden_channels
SKIP = 8           # skip_channels
KSIZE = 3          # kernel_size of the depthwise conv
DILATION = 2       # dilation
CAUSAL = False
EPS = 1e-5         # GroupNorm eps (PyTorch default)

_PAD = (KSIZE - 1) * DILATION
PAD_L = _PAD if CAUSAL else _PAD // 2
PAD_R = 0 if CAUSAL else _PAD - PAD_L


def _group_norm_1g(h, gamma, beta):
    """nn.GroupNorm(num_groups=1) on a single-sample (C, T) tile."""
    mean = jnp.mean(h, keepdims=True)                       # (1, 1)
    var = jnp.mean(jnp.square(h - mean), keepdims=True)     # biased variance
    return (h - mean) * jax.lax.rsqrt(var + EPS) * gamma + beta


def _conv1d_block_kernel(x_ref, w1_ref, b1_ref, g1_ref, be1_ref,
                         dw_ref, db_ref, g2_ref, be2_ref,
                         wres_ref, bres_ref, wskip_ref, bskip_ref,
                         alpha_ref, out_ref, skip_ref):
    # x_ref: (Cin, T)  w1: (H, Cin)  dw: (H, K)  wres: (Cin, H)  wskip: (Sc, H)
    # per-channel params are (H, 1)/(Cin, 1)/(Sc, 1); alpha_ref: (1, 2)
    x = x_ref[...]                                           # (Cin, T)
    T = x.shape[-1]
    a1 = alpha_ref[0:1, 0:1]                                 # PReLU slopes (1,1)
    a2 = alpha_ref[0:1, 1:2]

    # ---- 1x1 conv (MXU): (H, Cin) @ (Cin, T) -> (H, T), lane-dense along T.
    h = jnp.dot(w1_ref[...], x, preferred_element_type=jnp.float32) + b1_ref[...]
    h = jnp.where(h >= 0, h, a1 * h)                         # PReLU 1
    h = _group_norm_1g(h, g1_ref[...], be1_ref[...])         # gLN 1

    # ---- pad + dilated depthwise conv as K lane-dense broadcast-FMAs (VPU).
    hp = jnp.pad(h, ((0, 0), (PAD_L, PAD_R)))                # (H, T + pad)
    y = dw_ref[:, 0:1] * hp[:, 0:T]
    for k in range(1, KSIZE):
        y = y + dw_ref[:, k:k + 1] * hp[:, k * DILATION:k * DILATION + T]
    y = y + db_ref[...]
    y = jnp.where(y >= 0, y, a2 * y)                         # PReLU 2
    y = _group_norm_1g(y, g2_ref[...], be2_ref[...])         # gLN 2

    # ---- residual 1x1 conv back to input channels + skip 1x1 conv (MXU).
    res = jnp.dot(wres_ref[...], y, preferred_element_type=jnp.float32) + bres_ref[...]
    out_ref[...] = (x + res).astype(out_ref.dtype)           # (Cin, T)
    skip_ref[...] = (jnp.dot(wskip_ref[...], y, preferred_element_type=jnp.float32)
                     + bskip_ref[...]).astype(skip_ref.dtype)  # (Sc, T)


def conv1d_block_forward(x, p):
    """x: (B, Cin, T) f32, p: dict of parameters.  Returns (residual, skip)."""
    B, Cin, T = x.shape
    H = p["w1"].shape[0]
    Sc = p["wskip"].shape[0]

    def full2d(shape):
        return pl.BlockSpec(shape, lambda b: (0, 0))

    out, skip = pl.pallas_call(
        _conv1d_block_kernel,
        out_shape=(jax.ShapeDtypeStruct((B, Cin, T), jnp.float32),
                   jax.ShapeDtypeStruct((B, Sc, T), jnp.float32)),
        grid_spec=pltpu.PrefetchScalarGridSpec(
            num_scalar_prefetch=0,
            grid=(B,),
            in_specs=[
                pl.BlockSpec((None, Cin, T), lambda b: (b, 0, 0)),   # x (per batch)
                full2d((H, Cin)),    # w1
                full2d((H, 1)),      # b1
                full2d((H, 1)),      # gamma1
                full2d((H, 1)),      # beta1
                full2d((H, KSIZE)),  # depthwise weight
                full2d((H, 1)),      # depthwise bias
                full2d((H, 1)),      # gamma2
                full2d((H, 1)),      # beta2
                full2d((Cin, H)),    # res_conv weight
                full2d((Cin, 1)),    # res_conv bias
                full2d((Sc, H)),     # skip_conv weight
                full2d((Sc, 1)),     # skip_conv bias
                full2d((1, 2)),      # PReLU slopes [a1, a2]
            ],
            out_specs=[
                pl.BlockSpec((None, Cin, T), lambda b: (b, 0, 0)),
                pl.BlockSpec((None, Sc, T), lambda b: (b, 0, 0)),
            ],
        ),
        compiler_params=pltpu.CompilerParams(
            dimension_semantics=("parallel",),   # shards batch across v7x's 2 TCs
        ),
    )(x, p["w1"], p["b1"], p["g1"], p["be1"], p["dw"], p["db"],
      p["g2"], p["be2"], p["wres"], p["bres"], p["wskip"], p["bskip"],
      p["alphas"])
    return out, skip


# ---------------------------- pure-JAX reference -----------------------------
def _group_norm_ref(h, gamma, beta):
    mean = jnp.mean(h, axis=(1, 2), keepdims=True)
    var = jnp.mean(jnp.square(h - mean), axis=(1, 2), keepdims=True)
    return (h - mean) * jax.lax.rsqrt(var + EPS) * gamma[None] + beta[None]


def conv1d_block_reference(x, p):
    HI = jax.lax.Precision.HIGHEST
    a1 = p["alphas"][0, 0]
    a2 = p["alphas"][0, 1]
    # 1x1 conv
    h = jnp.einsum("oc,bct->bot", p["w1"], x, precision=HI) + p["b1"][None]
    h = jnp.where(h >= 0, h, a1 * h)
    h = _group_norm_ref(h, p["g1"], p["be1"])
    # pad + depthwise dilated conv (groups = HID)
    hp = jnp.pad(h, ((0, 0), (0, 0), (PAD_L, PAD_R)))
    y = jax.lax.conv_general_dilated(
        hp, p["dw"][:, None, :], window_strides=(1,), padding="VALID",
        rhs_dilation=(DILATION,), dimension_numbers=("NCH", "OIH", "NCH"),
        feature_group_count=HID, precision=HI) + p["db"][None]
    y = jnp.where(y >= 0, y, a2 * y)
    y = _group_norm_ref(y, p["g2"], p["be2"])
    out = x + jnp.einsum("oc,bct->bot", p["wres"], y, precision=HI) + p["bres"][None]
    skip = jnp.einsum("oc,bct->bot", p["wskip"], y, precision=HI) + p["bskip"][None]
    return out, skip


if __name__ == "__main__":
    B, T = 2, 16
    key = jax.random.PRNGKey(0)
    ks = jax.random.split(key, 14)
    f32 = jnp.float32

    p = {
        "w1":    jax.random.normal(ks[0], (HID, CIN), f32) / jnp.sqrt(CIN),
        "b1":    0.1 * jax.random.normal(ks[1], (HID, 1), f32),
        "g1":    1.0 + 0.1 * jax.random.normal(ks[2], (HID, 1), f32),
        "be1":   0.1 * jax.random.normal(ks[3], (HID, 1), f32),
        "dw":    jax.random.normal(ks[4], (HID, KSIZE), f32) / jnp.sqrt(KSIZE),
        "db":    0.1 * jax.random.normal(ks[5], (HID, 1), f32),
        "g2":    1.0 + 0.1 * jax.random.normal(ks[6], (HID, 1), f32),
        "be2":   0.1 * jax.random.normal(ks[7], (HID, 1), f32),
        "wres":  jax.random.normal(ks[8], (CIN, HID), f32) / jnp.sqrt(HID),
        "bres":  0.1 * jax.random.normal(ks[9], (CIN, 1), f32),
        "wskip": jax.random.normal(ks[10], (SKIP, HID), f32) / jnp.sqrt(HID),
        "bskip": 0.1 * jax.random.normal(ks[11], (SKIP, 1), f32),
        "alphas": jnp.array([[0.25, 0.10]], f32),   # PReLU slopes
    }
    x = jax.random.normal(ks[12], (B, CIN, T), f32)

    out, skip = conv1d_block_forward(x, p)
    out = jax.block_until_ready(out)
    skip = jax.block_until_ready(skip)

    ref_out, ref_skip = conv1d_block_reference(x, p)
    ref_out = jax.block_until_ready(ref_out)
    ref_skip = jax.block_until_ready(ref_skip)

    assert out.shape == (B, CIN, T) and skip.shape == (B, SKIP, T)
    # Tolerance sized for MXU default-precision f32 matmul passes vs. the
    # HIGHEST-precision XLA reference; in practice they agree far tighter.
    np.testing.assert_allclose(np.asarray(out), np.asarray(ref_out),
                               rtol=2e-2, atol=2e-2)
    np.testing.assert_allclose(np.asarray(skip), np.asarray(ref_skip),
                               rtol=2e-2, atol=2e-2)
    print("KERNEL_OK")
</pallas_src>

<mosaic_0001>
module attributes {stable_mosaic.version = 11 : i64} {
  func.func @_conv1d_block_kernel(%arg0: i32, %arg1: memref<1x4x16xf32, #tpu.memory_space<vmem>>, %arg2: memref<32x4xf32, #tpu.memory_space<vmem>>, %arg3: memref<32x1xf32, #tpu.memory_space<vmem>>, %arg4: memref<32x1xf32, #tpu.memory_space<vmem>>, %arg5: memref<32x1xf32, #tpu.memory_space<vmem>>, %arg6: memref<32x3xf32, #tpu.memory_space<vmem>>, %arg7: memref<32x1xf32, #tpu.memory_space<vmem>>, %arg8: memref<32x1xf32, #tpu.memory_space<vmem>>, %arg9: memref<32x1xf32, #tpu.memory_space<vmem>>, %arg10: memref<4x32xf32, #tpu.memory_space<vmem>>, %arg11: memref<4x1xf32, #tpu.memory_space<vmem>>, %arg12: memref<8x32xf32, #tpu.memory_space<vmem>>, %arg13: memref<8x1xf32, #tpu.memory_space<vmem>>, %arg14: memref<1x2xf32, #tpu.memory_space<vmem>>, %arg15: memref<1x4x16xf32, #tpu.memory_space<vmem>>, %arg16: memref<1x8x16xf32, #tpu.memory_space<vmem>>) attributes {dimension_semantics = [#tpu.dimension_semantics<parallel>], iteration_bounds = array<i64: 2>, scalar_prefetch = 0 : i64, scratch_operands = 0 : i64, tpu.core_type = #tpu.core_type<tc>, window_params = [{transform_indices = @transform_0, window_bounds = array<i64: 1, 4, 16>}, {pipeline_mode = #tpu.pipeline_mode<synchronous>, transform_indices = @transform_1, window_bounds = array<i64: 32, 4>}, {pipeline_mode = #tpu.pipeline_mode<synchronous>, transform_indices = @transform_2, window_bounds = array<i64: 32, 1>}, {pipeline_mode = #tpu.pipeline_mode<synchronous>, transform_indices = @transform_3, window_bounds = array<i64: 32, 1>}, {pipeline_mode = #tpu.pipeline_mode<synchronous>, transform_indices = @transform_4, window_bounds = array<i64: 32, 1>}, {pipeline_mode = #tpu.pipeline_mode<synchronous>, transform_indices = @transform_5, window_bounds = array<i64: 32, 3>}, {pipeline_mode = #tpu.pipeline_mode<synchronous>, transform_indices = @transform_6, window_bounds = array<i64: 32, 1>}, {pipeline_mode = #tpu.pipeline_mode<synchronous>, transform_indices = @transform_7, window_bounds = array<i64: 32, 1>}, {pipeline_mode = #tpu.pipeline_mode<synchronous>, transform_indices = @transform_8, window_bounds = array<i64: 32, 1>}, {pipeline_mode = #tpu.pipeline_mode<synchronous>, transform_indices = @transform_9, window_bounds = array<i64: 4, 32>}, {pipeline_mode = #tpu.pipeline_mode<synchronous>, transform_indices = @transform_10, window_bounds = array<i64: 4, 1>}, {pipeline_mode = #tpu.pipeline_mode<synchronous>, transform_indices = @transform_11, window_bounds = array<i64: 8, 32>}, {pipeline_mode = #tpu.pipeline_mode<synchronous>, transform_indices = @transform_12, window_bounds = array<i64: 8, 1>}, {pipeline_mode = #tpu.pipeline_mode<synchronous>, transform_indices = @transform_13, window_bounds = array<i64: 1, 2>}, {transform_indices = @transform_14, window_bounds = array<i64: 1, 4, 16>}, {transform_indices = @transform_15, window_bounds = array<i64: 1, 8, 16>}]} {
    %c0 = arith.constant 0 : index
    %c0_0 = arith.constant 0 : index
    %c0_1 = arith.constant 0 : index
    %0 = vector.load %arg1[%c0, %c0_0, %c0_1] : memref<1x4x16xf32, #tpu.memory_space<vmem>>, vector<1x4x16xf32>
    %1 = vector.shape_cast %0 : vector<1x4x16xf32> to vector<4x16xf32>
    %c0_2 = arith.constant 0 : index
    %c0_3 = arith.constant 0 : index
    %2 = vector.load %arg14[%c0_2, %c0_3] : memref<1x2xf32, #tpu.memory_space<vmem>>, vector<1x1xf32>
    %c0_4 = arith.constant 0 : index
    %c1 = arith.constant 1 : index
    %3 = vector.load %arg14[%c0_4, %c1] : memref<1x2xf32, #tpu.memory_space<vmem>>, vector<1x1xf32>
    %c0_5 = arith.constant 0 : index
    %c0_6 = arith.constant 0 : index
    %4 = vector.load %arg2[%c0_5, %c0_6] : memref<32x4xf32, #tpu.memory_space<vmem>>, vector<32x4xf32>
    %cst = arith.constant dense<0.000000e+00> : vector<32x16xf32>
    %5 = tpu.matmul %4, %1, %cst {dimension_numbers = #tpu.dot_dimension_numbers<[1], [0], [0], [1], [0, 0, 1, 1], [], []>} : vector<32x4xf32>, vector<4x16xf32>, vector<32x16xf32> -> vector<32x16xf32>
    %c0_7 = arith.constant 0 : index
    %c0_8 = arith.constant 0 : index
    %6 = vector.load %arg3[%c0_7, %c0_8] : memref<32x1xf32, #tpu.memory_space<vmem>>, vector<32x1xf32>
    %7 = vector.broadcast %6 : vector<32x1xf32> to vector<32x16xf32>
    %8 = arith.addf %5, %7 : vector<32x16xf32>
    %cst_9 = arith.constant 0.000000e+00 : f32
    %9 = vector.broadcast %cst_9 : f32 to vector<32x16xf32>
    %10 = arith.cmpf oge, %8, %9 : vector<32x16xf32>
    %11 = vector.broadcast %2 : vector<1x1xf32> to vector<32x16xf32>
    %12 = arith.mulf %11, %8 : vector<32x16xf32>
    %13 = arith.select %10, %8, %12 : vector<32x16xi1>, vector<32x16xf32>
    %c0_10 = arith.constant 0 : index
    %c0_11 = arith.constant 0 : index
    %14 = vector.load %arg4[%c0_10, %c0_11] : memref<32x1xf32, #tpu.memory_space<vmem>>, vector<32x1xf32>
    %c0_12 = arith.constant 0 : index
    %c0_13 = arith.constant 0 : index
    %15 = vector.load %arg5[%c0_12, %c0_13] : memref<32x1xf32, #tpu.memory_space<vmem>>, vector<32x1xf32>
    %16 = vector.shape_cast %13 : vector<32x16xf32> to vector<1x32x16xf32>
    %cst_14 = arith.constant dense<0.000000e+00> : vector<1xf32>
    %17 = vector.multi_reduction <add>, %16, %cst_14 [1, 2] : vector<1x32x16xf32> to vector<1xf32>
    %18 = vector.shape_cast %17 : vector<1xf32> to vector<1x1x1xf32>
    %19 = vector.extract %18[0, 0, 0] : f32 from vector<1x1x1xf32>
    %20 = vector.broadcast %19 : f32 to vector<1x1xf32>
    %cst_15 = arith.constant 5.120000e+02 : f32
    %21 = vector.broadcast %cst_15 : f32 to vector<1x1xf32>
    %22 = arith.divf %20, %21 : vector<1x1xf32>
    %23 = vector.broadcast %22 : vector<1x1xf32> to vector<32x16xf32>
    %24 = arith.subf %13, %23 : vector<32x16xf32>
    %25 = arith.mulf %24, %24 : vector<32x16xf32>
    %26 = vector.shape_cast %25 : vector<32x16xf32> to vector<1x32x16xf32>
    %cst_16 = arith.constant dense<0.000000e+00> : vector<1xf32>
    %27 = vector.multi_reduction <add>, %26, %cst_16 [1, 2] : vector<1x32x16xf32> to vector<1xf32>
    %28 = vector.shape_cast %27 : vector<1xf32> to vector<1x1x1xf32>
    %29 = vector.extract %28[0, 0, 0] : f32 from vector<1x1x1xf32>
    %30 = vector.broadcast %29 : f32 to vector<1x1xf32>
    %cst_17 = arith.constant 5.120000e+02 : f32
    %31 = vector.broadcast %cst_17 : f32 to vector<1x1xf32>
    %32 = arith.divf %30, %31 : vector<1x1xf32>
    %33 = vector.broadcast %22 : vector<1x1xf32> to vector<32x16xf32>
    %34 = arith.subf %13, %33 : vector<32x16xf32>
    %cst_18 = arith.constant 9.99999974E-6 : f32
    %35 = vector.broadcast %cst_18 : f32 to vector<1x1xf32>
    %36 = arith.addf %32, %35 : vector<1x1xf32>
    %37 = math.rsqrt %36 : vector<1x1xf32>
    %38 = vector.broadcast %37 : vector<1x1xf32> to vector<32x16xf32>
    %39 = arith.mulf %34, %38 : vector<32x16xf32>
    %40 = vector.broadcast %14 : vector<32x1xf32> to vector<32x16xf32>
    %41 = arith.mulf %39, %40 : vector<32x16xf32>
    %42 = vector.broadcast %15 : vector<32x1xf32> to vector<32x16xf32>
    %43 = arith.addf %41, %42 : vector<32x16xf32>
    %c0_i32 = arith.constant 0 : i32
    %44 = arith.sitofp %c0_i32 : i32 to f32
    %45 = vector.broadcast %44 : f32 to vector<32x2xf32>
    %46 = tpu.concatenate %45, %43 in 1 : vector<32x2xf32>, vector<32x16xf32> -> vector<32x18xf32>
    %47 = vector.broadcast %44 : f32 to vector<32x2xf32>
    %48 = tpu.concatenate %46, %47 in 1 : vector<32x18xf32>, vector<32x2xf32> -> vector<32x20xf32>
    %c0_19 = arith.constant 0 : index
    %c0_20 = arith.constant 0 : index
    %49 = vector.load %arg6[%c0_19, %c0_20] : memref<32x3xf32, #tpu.memory_space<vmem>>, vector<32x1xf32>
    %50 = vector.extract_strided_slice %48 {offsets = [0, 0], sizes = [32, 16], strides = [1, 1]} : vector<32x20xf32> to vector<32x16xf32>
    %51 = vector.broadcast %49 : vector<32x1xf32> to vector<32x16xf32>
    %52 = arith.mulf %51, %50 : vector<32x16xf32>
    %c0_21 = arith.constant 0 : index
    %c1_22 = arith.constant 1 : index
    %53 = vector.load %arg6[%c0_21, %c1_22] : memref<32x3xf32, #tpu.memory_space<vmem>>, vector<32x1xf32>
    %54 = vector.extract_strided_slice %48 {offsets = [0, 2], sizes = [32, 16], strides = [1, 1]} : vector<32x20xf32> to vector<32x16xf32>
    %55 = vector.broadcast %53 : vector<32x1xf32> to vector<32x16xf32>
    %56 = arith.mulf %55, %54 : vector<32x16xf32>
    %57 = arith.addf %52, %56 : vector<32x16xf32>
    %c0_23 = arith.constant 0 : index
    %c2 = arith.constant 2 : index
    %58 = vector.load %arg6[%c0_23, %c2] : memref<32x3xf32, #tpu.memory_space<vmem>>, vector<32x1xf32>
    %59 = vector.extract_strided_slice %48 {offsets = [0, 4], sizes = [32, 16], strides = [1, 1]} : vector<32x20xf32> to vector<32x16xf32>
    %60 = vector.broadcast %58 : vector<32x1xf32> to vector<32x16xf32>
    %61 = arith.mulf %60, %59 : vector<32x16xf32>
    %62 = arith.addf %57, %61 : vector<32x16xf32>
    %c0_24 = arith.constant 0 : index
    %c0_25 = arith.constant 0 : index
    %63 = vector.load %arg7[%c0_24, %c0_25] : memref<32x1xf32, #tpu.memory_space<vmem>>, vector<32x1xf32>
    %64 = vector.broadcast %63 : vector<32x1xf32> to vector<32x16xf32>
    %65 = arith.addf %62, %64 : vector<32x16xf32>
    %cst_26 = arith.constant 0.000000e+00 : f32
    %66 = vector.broadcast %cst_26 : f32 to vector<32x16xf32>
    %67 = arith.cmpf oge, %65, %66 : vector<32x16xf32>
    %68 = vector.broadcast %3 : vector<1x1xf32> to vector<32x16xf32>
    %69 = arith.mulf %68, %65 : vector<32x16xf32>
    %70 = arith.select %67, %65, %69 : vector<32x16xi1>, vector<32x16xf32>
    %c0_27 = arith.constant 0 : index
    %c0_28 = arith.constant 0 : index
    %71 = vector.load %arg8[%c0_27, %c0_28] : memref<32x1xf32, #tpu.memory_space<vmem>>, vector<32x1xf32>
    %c0_29 = arith.constant 0 : index
    %c0_30 = arith.constant 0 : index
    %72 = vector.load %arg9[%c0_29, %c0_30] : memref<32x1xf32, #tpu.memory_space<vmem>>, vector<32x1xf32>
    %73 = vector.shape_cast %70 : vector<32x16xf32> to vector<1x32x16xf32>
    %cst_31 = arith.constant dense<0.000000e+00> : vector<1xf32>
    %74 = vector.multi_reduction <add>, %73, %cst_31 [1, 2] : vector<1x32x16xf32> to vector<1xf32>
    %75 = vector.shape_cast %74 : vector<1xf32> to vector<1x1x1xf32>
    %76 = vector.extract %75[0, 0, 0] : f32 from vector<1x1x1xf32>
    %77 = vector.broadcast %76 : f32 to vector<1x1xf32>
    %cst_32 = arith.constant 5.120000e+02 : f32
    %78 = vector.broadcast %cst_32 : f32 to vector<1x1xf32>
    %79 = arith.divf %77, %78 : vector<1x1xf32>
    %80 = vector.broadcast %79 : vector<1x1xf32> to vector<32x16xf32>
    %81 = arith.subf %70, %80 : vector<32x16xf32>
    %82 = arith.mulf %81, %81 : vector<32x16xf32>
    %83 = vector.shape_cast %82 : vector<32x16xf32> to vector<1x32x16xf32>
    %cst_33 = arith.constant dense<0.000000e+00> : vector<1xf32>
    %84 = vector.multi_reduction <add>, %83, %cst_33 [1, 2] : vector<1x32x16xf32> to vector<1xf32>
    %85 = vector.shape_cast %84 : vector<1xf32> to vector<1x1x1xf32>
    %86 = vector.extract %85[0, 0, 0] : f32 from vector<1x1x1xf32>
    %87 = vector.broadcast %86 : f32 to vector<1x1xf32>
    %cst_34 = arith.constant 5.120000e+02 : f32
    %88 = vector.broadcast %cst_34 : f32 to vector<1x1xf32>
    %89 = arith.divf %87, %88 : vector<1x1xf32>
    %90 = vector.broadcast %79 : vector<1x1xf32> to vector<32x16xf32>
    %91 = arith.subf %70, %90 : vector<32x16xf32>
    %cst_35 = arith.constant 9.99999974E-6 : f32
    %92 = vector.broadcast %cst_35 : f32 to vector<1x1xf32>
    %93 = arith.addf %89, %92 : vector<1x1xf32>
    %94 = math.rsqrt %93 : vector<1x1xf32>
    %95 = vector.broadcast %94 : vector<1x1xf32> to vector<32x16xf32>
    %96 = arith.mulf %91, %95 : vector<32x16xf32>
    %97 = vector.broadcast %71 : vector<32x1xf32> to vector<32x16xf32>
    %98 = arith.mulf %96, %97 : vector<32x16xf32>
    %99 = vector.broadcast %72 : vector<32x1xf32> to vector<32x16xf32>
    %100 = arith.addf %98, %99 : vector<32x16xf32>
    %c0_36 = arith.constant 0 : index
    %c0_37 = arith.constant 0 : index
    %101 = vector.load %arg10[%c0_36, %c0_37] : memref<4x32xf32, #tpu.memory_space<vmem>>, vector<4x32xf32>
    %cst_38 = arith.constant dense<0.000000e+00> : vector<4x16xf32>
    %102 = tpu.matmul %101, %100, %cst_38 {dimension_numbers = #tpu.dot_dimension_numbers<[1], [0], [0], [1], [0, 0, 1, 1], [], []>} : vector<4x32xf32>, vector<32x16xf32>, vector<4x16xf32> -> vector<4x16xf32>
    %c0_39 = arith.constant 0 : index
    %c0_40 = arith.constant 0 : index
    %103 = vector.load %arg11[%c0_39, %c0_40] : memref<4x1xf32, #tpu.memory_space<vmem>>, vector<4x1xf32>
    %104 = vector.broadcast %103 : vector<4x1xf32> to vector<4x16xf32>
    %105 = arith.addf %102, %104 : vector<4x16xf32>
    %106 = arith.addf %1, %105 : vector<4x16xf32>
    %c0_41 = arith.constant 0 : index
    %c0_42 = arith.constant 0 : index
    %c0_43 = arith.constant 0 : index
    %107 = vector.load %arg15[%c0_41, %c0_42, %c0_43] : memref<1x4x16xf32, #tpu.memory_space<vmem>>, vector<1x4x16xf32>
    %108 = vector.shape_cast %107 : vector<1x4x16xf32> to vector<4x16xf32>
    %109 = vector.shape_cast %106 : vector<4x16xf32> to vector<1x4x16xf32>
    tpu.vector_store %arg15[%c0_41, %c0_42, %c0_43], %109 {strides = array<i32>} : memref<1x4x16xf32, #tpu.memory_space<vmem>>, vector<1x4x16xf32>,
    %c0_44 = arith.constant 0 : index
    %c0_45 = arith.constant 0 : index
    %110 = vector.load %arg12[%c0_44, %c0_45] : memref<8x32xf32, #tpu.memory_space<vmem>>, vector<8x32xf32>
    %cst_46 = arith.constant dense<0.000000e+00> : vector<8x16xf32>
    %111 = tpu.matmul %110, %100, %cst_46 {dimension_numbers = #tpu.dot_dimension_numbers<[1], [0], [0], [1], [0, 0, 1, 1], [], []>} : vector<8x32xf32>, vector<32x16xf32>, vector<8x16xf32> -> vector<8x16xf32>
    %c0_47 = arith.constant 0 : index
    %c0_48 = arith.constant 0 : index
    %112 = vector.load %arg13[%c0_47, %c0_48] : memref<8x1xf32, #tpu.memory_space<vmem>>, vector<8x1xf32>
    %113 = vector.broadcast %112 : vector<8x1xf32> to vector<8x16xf32>
    %114 = arith.addf %111, %113 : vector<8x16xf32>
    %c0_49 = arith.constant 0 : index
    %c0_50 = arith.constant 0 : index
    %c0_51 = arith.constant 0 : index
    %115 = vector.load %arg16[%c0_49, %c0_50, %c0_51] : memref<1x8x16xf32, #tpu.memory_space<vmem>>, vector<1x8x16xf32>
    %116 = vector.shape_cast %115 : vector<1x8x16xf32> to vector<8x16xf32>
    %117 = vector.shape_cast %114 : vector<8x16xf32> to vector<1x8x16xf32>
    tpu.vector_store %arg16[%c0_49, %c0_50, %c0_51], %117 {strides = array<i32>} : memref<1x8x16xf32, #tpu.memory_space<vmem>>, vector<1x8x16xf32>,
    return
  }
  func.func @transform_0(%arg0: i32) -> (i32, i32, i32) {
    %c0_i32 = arith.constant 0 : i32
    %c0_i32_0 = arith.constant 0 : i32
    %c0_i32_1 = arith.constant 0 : i32
    return %arg0, %c0_i32, %c0_i32_0 : i32, i32, i32
  }
  func.func @transform_1(%arg0: i32) -> (i32, i32) {
    %c0_i32 = arith.constant 0 : i32
    %c0_i32_0 = arith.constant 0 : i32
    %c0_i32_1 = arith.constant 0 : i32
    return %c0_i32, %c0_i32_0 : i32, i32
  }
  func.func @transform_2(%arg0: i32) -> (i32, i32) {
    %c0_i32 = arith.constant 0 : i32
    %c0_i32_0 = arith.constant 0 : i32
    %c0_i32_1 = arith.constant 0 : i32
    return %c0_i32, %c0_i32_0 : i32, i32
  }
  func.func @transform_3(%arg0: i32) -> (i32, i32) {
    %c0_i32 = arith.constant 0 : i32
    %c0_i32_0 = arith.constant 0 : i32
    %c0_i32_1 = arith.constant 0 : i32
    return %c0_i32, %c0_i32_0 : i32, i32
  }
  func.func @transform_4(%arg0: i32) -> (i32, i32) {
    %c0_i32 = arith.constant 0 : i32
    %c0_i32_0 = arith.constant 0 : i32
    %c0_i32_1 = arith.constant 0 : i32
    return %c0_i32, %c0_i32_0 : i32, i32
  }
  func.func @transform_5(%arg0: i32) -> (i32, i32) {
    %c0_i32 = arith.constant 0 : i32
    %c0_i32_0 = arith.constant 0 : i32
    %c0_i32_1 = arith.constant 0 : i32
    return %c0_i32, %c0_i32_0 : i32, i32
  }
  func.func @transform_6(%arg0: i32) -> (i32, i32) {
    %c0_i32 = arith.constant 0 : i32
    %c0_i32_0 = arith.constant 0 : i32
    %c0_i32_1 = arith.constant 0 : i32
    return %c0_i32, %c0_i32_0 : i32, i32
  }
  func.func @transform_7(%arg0: i32) -> (i32, i32) {
    %c0_i32 = arith.constant 0 : i32
    %c0_i32_0 = arith.constant 0 : i32
    %c0_i32_1 = arith.constant 0 : i32
    return %c0_i32, %c0_i32_0 : i32, i32
  }
  func.func @transform_8(%arg0: i32) -> (i32, i32) {
    %c0_i32 = arith.constant 0 : i32
    %c0_i32_0 = arith.constant 0 : i32
    %c0_i32_1 = arith.constant 0 : i32
    return %c0_i32, %c0_i32_0 : i32, i32
  }
  func.func @transform_9(%arg0: i32) -> (i32, i32) {
    %c0_i32 = arith.constant 0 : i32
    %c0_i32_0 = arith.constant 0 : i32
    %c0_i32_1 = arith.constant 0 : i32
    return %c0_i32, %c0_i32_0 : i32, i32
  }
  func.func @transform_10(%arg0: i32) -> (i32, i32) {
    %c0_i32 = arith.constant 0 : i32
    %c0_i32_0 = arith.constant 0 : i32
    %c0_i32_1 = arith.constant 0 : i32
    return %c0_i32, %c0_i32_0 : i32, i32
  }
  func.func @transform_11(%arg0: i32) -> (i32, i32) {
    %c0_i32 = arith.constant 0 : i32
    %c0_i32_0 = arith.constant 0 : i32
    %c0_i32_1 = arith.constant 0 : i32
    return %c0_i32, %c0_i32_0 : i32, i32
  }
  func.func @transform_12(%arg0: i32) -> (i32, i32) {
    %c0_i32 = arith.constant 0 : i32
    %c0_i32_0 = arith.constant 0 : i32
    %c0_i32_1 = arith.constant 0 : i32
    return %c0_i32, %c0_i32_0 : i32, i32
  }
  func.func @transform_13(%arg0: i32) -> (i32, i32) {
    %c0_i32 = arith.constant 0 : i32
    %c0_i32_0 = arith.constant 0 : i32
    %c0_i32_1 = arith.constant 0 : i32
    return %c0_i32, %c0_i32_0 : i32, i32
  }
  func.func @transform_14(%arg0: i32) -> (i32, i32, i32) {
    %c0_i32 = arith.constant 0 : i32
    %c0_i32_0 = arith.constant 0 : i32
    %c0_i32_1 = arith.constant 0 : i32
    return %arg0, %c0_i32, %c0_i32_0 : i32, i32, i32
  }
  func.func @transform_15(%arg0: i32) -> (i32, i32, i32) {
    %c0_i32 = arith.constant 0 : i32
    %c0_i32_0 = arith.constant 0 : i32
    %c0_i32_1 = arith.constant 0 : i32
    return %arg0, %c0_i32, %c0_i32_0 : i32, i32, i32
  }
}

</mosaic_0001>

<llo_original>
// kernel: tpu_custom_call.1
$region0: #{tpu_custom_call.1}
  #allocation0 [shape = 'u32[]', space=smem, size = 0x4, offset = 0x4, fixed_abs, tag = 'smem constant byte address 0x4 - core index']
  #allocation1 [shape = 'u32[144,128]{1,0:T(1,128)}', space=vmem, size = 0x12000, scoped, tag = 'internal scratch']
  %s0 = inlined_call_operand.vmem [shape: f32[2,4,16], index: 0, kind: input, shape index: {}]
  %s1 = inlined_call_operand.vmem [shape: f32[32,4], index: 1, kind: input, shape index: {}]
  %s2 = inlined_call_operand.vmem [shape: f32[32,1], index: 2, kind: input, shape index: {}]
  %s3 = inlined_call_operand.vmem [shape: f32[32,1], index: 3, kind: input, shape index: {}]
  %s4 = inlined_call_operand.vmem [shape: f32[32,1], index: 4, kind: input, shape index: {}]
  %s5 = inlined_call_operand.vmem [shape: f32[32,3], index: 5, kind: input, shape index: {}]
  %s6 = inlined_call_operand.vmem [shape: f32[32,1], index: 6, kind: input, shape index: {}]
  %s7 = inlined_call_operand.vmem [shape: f32[32,1], index: 7, kind: input, shape index: {}]
  %s8 = inlined_call_operand.vmem [shape: f32[32,1], index: 8, kind: input, shape index: {}]
  %s9 = inlined_call_operand.vmem [shape: f32[4,32], index: 9, kind: input, shape index: {}]
  %s10 = inlined_call_operand.vmem [shape: f32[4,1], index: 10, kind: input, shape index: {}]
  %s11 = inlined_call_operand.vmem [shape: f32[8,32], index: 11, kind: input, shape index: {}]
  %s12 = inlined_call_operand.vmem [shape: f32[8,1], index: 12, kind: input, shape index: {}]
  %s13 = inlined_call_operand.vmem [shape: f32[1,2], index: 13, kind: input, shape index: {}]
  %s14 = inlined_call_operand.hbm [shape: f32[2,4,16], index: 14, kind: output, shape index: {0}]
  %s15 = inlined_call_operand.hbm [shape: f32[2,8,16], index: 15, kind: output, shape index: {1}]
  %16 = xla_tuple %s14, %s15
  %s17 = sld [smem:[#allocation0]]
  $region97: #{tpu_custom_call.1} parent=0
    _
  %s19 = ssub.s32 1, %s17
  %s20 = scalar_select 0, %s19, %s17
  $region1: #{tpu_custom_call.1} parent=0
    #allocation2 [shape = 'u8[4096]{0}', space=vmem, size = 0x1000, scoped, tag = 'output window, operand 0']
    #allocation3 [shape = 's32[2]{0}', space=sflag, size = 0x8, scoped, tag = 'scoped memory for tpu_custom_call.1']
    #allocation4 [shape = 'u8[8192]{0}', space=vmem, size = 0x2000, scoped, tag = 'output window, operand 1']
    #allocation5 [shape = 's32[2]{0}', space=sflag, size = 0x8, scoped, tag = 'scoped memory for tpu_custom_call.1']
    %21 = vsyncpa [#allocation3], 0
    %s22 = scalar_lea.sflag [#allocation3], 1
    %23 = vsyncpa %s22, 0
    %24 = vsyncpa [#allocation5], 0
    %s25 = scalar_lea.sflag [#allocation5], 1
    %26 = vsyncpa %s25, 0
    loop: start=0, step=1, limit=4
    $region2: #{tpu_custom_call.1} parent=1 // loop_pre_header
      _
    $region3: #{tpu_custom_call.1} parent=1 // loop_header
      %s28 = sphi 0, %s32
      %p29 = scmp.ge.s32.totalorder %s28, 4
      %s38 = sphi 0, %s40
      %s41 = sphi 0, %s38
      %s42 = sphi 0, %s41
      %s58 = sphi 0, %s42
      %s62 = sphi 0, %s62
      %s64 = sphi 0, %s62
      %s65 = sphi 0, %s64
      %s79 = sphi 0, %s65
      %s83 = sphi 0, %s83
      %s85 = sphi 0, %s83
      %s86 = sphi 0, %s85
      %s100 = sphi 0, %s86
      %s104 = sphi 0, %s104
      %s106 = sphi 0, %s104
      %s107 = sphi 0, %s106
      %s121 = sphi 0, %s107
      %s125 = sphi 0, %s125
      %s127 = sphi 0, %s125
      %s128 = sphi 0, %s127
      %s142 = sphi 0, %s128
      %s146 = sphi 0, %s146
      %s148 = sphi 0, %s146
      %s149 = sphi 0, %s148
      %s163 = sphi 0, %s149
      %s167 = sphi 0, %s167
      %s169 = sphi 0, %s167
      %s170 = sphi 0, %s169
      %s184 = sphi 0, %s170
      %s188 = sphi 0, %s188
      %s190 = sphi 0, %s188
      %s191 = sphi 0, %s190
      %s205 = sphi 0, %s191
      %s209 = sphi 0, %s209
      %s211 = sphi 0, %s209
      %s212 = sphi 0, %s211
      %s226 = sphi 0, %s212
      %s230 = sphi 0, %s230
      %s232 = sphi 0, %s230
      %s233 = sphi 0, %s232
      %s247 = sphi 0, %s233
      %s251 = sphi 0, %s251
      %s253 = sphi 0, %s251
      %s254 = sphi 0, %s253
      %s268 = sphi 0, %s254
      %s272 = sphi 0, %s272
      %s274 = sphi 0, %s272
      %s275 = sphi 0, %s274
      %s289 = sphi 0, %s275
      %s293 = sphi 0, %s293
      %s295 = sphi 0, %s293
      %s296 = sphi 0, %s295
      %s310 = sphi 0, %s296
      %s314 = sphi 0, %s314
      %s316 = sphi 0, %s314
      %s317 = sphi 0, %s316
      %s331 = sphi 0, %s317
      %s337 = sphi 0, %s339
      %s340 = sphi 0, %s337
      %s341 = sphi 0, %s340
      %s357 = sphi 0, %s341
      %s363 = sphi 0, %s365
      %s366 = sphi 0, %s363
      %s367 = sphi 0, %s366
      %s383 = sphi 0, %s367
    $region4: #{tpu_custom_call.1} parent=1 // loop_header_branch
      %31 = sbr.rel (%p29) target = $region8
    $region5: #{tpu_custom_call.1} parent=1 // loop_body
      %s33 = ssub.s32 %s28, 1
      %s34 = ssub.s32 %s28, 2
      %s35 = sadd.s32 %s28, 1
      %s36 = ssub.s32 %s28, %s35
      %p37 = scmp.eq.s32.totalorder %s36, 0
      %s39 = sadd.s32 %s38, 1
      %s40 = scalar_select %p37, %s38, %s39
      %p43 = pneg %p37
      %p44 = scmp.eq.s32.totalorder %s28, 1
      %p45 = por %p43, %p44
      %p46 = scmp.ne.s32.totalorder %s38, %s41
      %p47 = scmp.eq.s32.totalorder %s28, 0
      %p48 = por %p46, %p47
      %p49 = scmp.ne.s32.totalorder %s38, %s41
      %p50 = scmp.eq.s32.totalorder %s33, 1
      %p51 = por %p49, %p50
      %p52 = scmp.ne.s32.totalorder %s41, %s42
      %p53 = scmp.eq.s32.totalorder %s33, 0
      %p54 = por %p52, %p53
      %p55 = scmp.ne.s32.totalorder %s41, %s42
      %p56 = scmp.eq.s32.totalorder %s34, 1
      %p57 = por %p55, %p56
      %p59 = scmp.ne.s32.totalorder %s42, %s58
      %p60 = scmp.eq.s32.totalorder %s34, 0
      %p61 = por %p59, %p60
      %s63 = sadd.s32 %s62, 1
      %p66 = scmp.eq.s32.totalorder %s28, 1
      %p67 = scmp.ne.s32.totalorder %s62, %s64
      %p68 = scmp.eq.s32.totalorder %s28, 0
      %p69 = por %p67, %p68
      %p70 = scmp.ne.s32.totalorder %s62, %s64
      %p71 = scmp.eq.s32.totalorder %s33, 1
      %p72 = por %p70, %p71
      %p73 = scmp.ne.s32.totalorder %s64, %s65
      %p74 = scmp.eq.s32.totalorder %s33, 0
      %p75 = por %p73, %p74
      %p76 = scmp.ne.s32.totalorder %s64, %s65
      %p77 = scmp.eq.s32.totalorder %s34, 1
      %p78 = por %p76, %p77
      %p80 = scmp.ne.s32.totalorder %s65, %s79
      %p81 = scmp.eq.s32.totalorder %s34, 0
      %p82 = por %p80, %p81
      %s84 = sadd.s32 %s83, 1
      %p87 = scmp.eq.s32.totalorder %s28, 1
      %p88 = scmp.ne.s32.totalorder %s83, %s85
      %p89 = scmp.eq.s32.totalorder %s28, 0
      %p90 = por %p88, %p89
      %p91 = scmp.ne.s32.totalorder %s83, %s85
      %p92 = scmp.eq.s32.totalorder %s33, 1
      %p93 = por %p91, %p92
      %p94 = scmp.ne.s32.totalorder %s85, %s86
      %p95 = scmp.eq.s32.totalorder %s33, 0
      %p96 = por %p94, %p95
      %p97 = scmp.ne.s32.totalorder %s85, %s86
      %p98 = scmp.eq.s32.totalorder %s34, 1
      %p99 = por %p97, %p98
      %p101 = scmp.ne.s32.totalorder %s86, %s100
      %p102 = scmp.eq.s32.totalorder %s34, 0
      %p103 = por %p101, %p102
      %s105 = sadd.s32 %s104, 1
      %p108 = scmp.eq.s32.totalorder %s28, 1
      %p109 = scmp.ne.s32.totalorder %s104, %s106
      %p110 = scmp.eq.s32.totalorder %s28, 0
      %p111 = por %p109, %p110
      %p112 = scmp.ne.s32.totalorder %s104, %s106
      %p113 = scmp.eq.s32.totalorder %s33, 1
      %p114 = por %p112, %p113
      %p115 = scmp.ne.s32.totalorder %s106, %s107
      %p116 = scmp.eq.s32.totalorder %s33, 0
      %p117 = por %p115, %p116
      %p118 = scmp.ne.s32.totalorder %s106, %s107
      %p119 = scmp.eq.s32.totalorder %s34, 1
      %p120 = por %p118, %p119
      %p122 = scmp.ne.s32.totalorder %s107, %s121
      %p123 = scmp.eq.s32.totalorder %s34, 0
      %p124 = por %p122, %p123
      %s126 = sadd.s32 %s125, 1
      %p129 = scmp.eq.s32.totalorder %s28, 1
      %p130 = scmp.ne.s32.totalorder %s125, %s127
      %p131 = scmp.eq.s32.totalorder %s28, 0
      %p132 = por %p130, %p131
      %p133 = scmp.ne.s32.totalorder %s125, %s127
      %p134 = scmp.eq.s32.totalorder %s33, 1
      %p135 = por %p133, %p134
      %p136 = scmp.ne.s32.totalorder %s127, %s128
      %p137 = scmp.eq.s32.totalorder %s33, 0
      %p138 = por %p136, %p137
      %p139 = scmp.ne.s32.totalorder %s127, %s128
      %p140 = scmp.eq.s32.totalorder %s34, 1
      %p141 = por %p139, %p140
      %p143 = scmp.ne.s32.totalorder %s128, %s142
      %p144 = scmp.eq.s32.totalorder %s34, 0
      %p145 = por %p143, %p144
      %s147 = sadd.s32 %s146, 1
      %p150 = scmp.eq.s32.totalorder %s28, 1
      %p151 = scmp.ne.s32.totalorder %s146, %s148
      %p152 = scmp.eq.s32.totalorder %s28, 0
      %p153 = por %p151, %p152
      %p154 = scmp.ne.s32.totalorder %s146, %s148
      %p155 = scmp.eq.s32.totalorder %s33, 1
      %p156 = por %p154, %p155
      %p157 = scmp.ne.s32.totalorder %s148, %s149
      %p158 = scmp.eq.s32.totalorder %s33, 0
      %p159 = por %p157, %p158
      %p160 = scmp.ne.s32.totalorder %s148, %s149
      %p161 = scmp.eq.s32.totalorder %s34, 1
      %p162 = por %p160, %p161
      %p164 = scmp.ne.s32.totalorder %s149, %s163
      %p165 = scmp.eq.s32.totalorder %s34, 0
      %p166 = por %p164, %p165
      %s168 = sadd.s32 %s167, 1
      %p171 = scmp.eq.s32.totalorder %s28, 1
      %p172 = scmp.ne.s32.totalorder %s167, %s169
      %p173 = scmp.eq.s32.totalorder %s28, 0
      %p174 = por %p172, %p173
      %p175 = scmp.ne.s32.totalorder %s167, %s169
      %p176 = scmp.eq.s32.totalorder %s33, 1
      %p177 = por %p175, %p176
      %p178 = scmp.ne.s32.totalorder %s169, %s170
      %p179 = scmp.eq.s32.totalorder %s33, 0
      %p180 = por %p178, %p179
      %p181 = scmp.ne.s32.totalorder %s169, %s170
      %p182 = scmp.eq.s32.totalorder %s34, 1
      %p183 = por %p181, %p182
      %p185 = scmp.ne.s32.totalorder %s170, %s184
      %p186 = scmp.eq.s32.totalorder %s34, 0
      %p187 = por %p185, %p186
      %s189 = sadd.s32 %s188, 1
      %p192 = scmp.eq.s32.totalorder %s28, 1
      %p193 = scmp.ne.s32.totalorder %s188, %s190
      %p194 = scmp.eq.s32.totalorder %s28, 0
      %p195 = por %p193, %p194
      %p196 = scmp.ne.s32.totalorder %s188, %s190
      %p197 = scmp.eq.s32.totalorder %s33, 1
      %p198 = por %p196, %p197
      %p199 = scmp.ne.s32.totalorder %s190, %s191
      %p200 = scmp.eq.s32.totalorder %s33, 0
      %p201 = por %p199, %p200
      %p202 = scmp.ne.s32.totalorder %s190, %s191
      %p203 = scmp.eq.s32.totalorder %s34, 1
      %p204 = por %p202, %p203
      %p206 = scmp.ne.s32.totalorder %s191, %s205
      %p207 = scmp.eq.s32.totalorder %s34, 0
      %p208 = por %p206, %p207
      %s210 = sadd.s32 %s209, 1
      %p213 = scmp.eq.s32.totalorder %s28, 1
      %p214 = scmp.ne.s32.totalorder %s209, %s211
      %p215 = scmp.eq.s32.totalorder %s28, 0
      %p216 = por %p214, %p215
      %p217 = scmp.ne.s32.totalorder %s209, %s211
      %p218 = scmp.eq.s32.totalorder %s33, 1
      %p219 = por %p217, %p218
      %p220 = scmp.ne.s32.totalorder %s211, %s212
      %p221 = scmp.eq.s32.totalorder %s33, 0
      %p222 = por %p220, %p221
      %p223 = scmp.ne.s32.totalorder %s211, %s212
      %p224 = scmp.eq.s32.totalorder %s34, 1
      %p225 = por %p223, %p224
      %p227 = scmp.ne.s32.totalorder %s212, %s226
      %p228 = scmp.eq.s32.totalorder %s34, 0
      %p229 = por %p227, %p228
      %s231 = sadd.s32 %s230, 1
      %p234 = scmp.eq.s32.totalorder %s28, 1
      %p235 = scmp.ne.s32.totalorder %s230, %s232
      %p236 = scmp.eq.s32.totalorder %s28, 0
      %p237 = por %p235, %p236
      %p238 = scmp.ne.s32.totalorder %s230, %s232
      %p239 = scmp.eq.s32.totalorder %s33, 1
      %p240 = por %p238, %p239
      %p241 = scmp.ne.s32.totalorder %s232, %s233
      %p242 = scmp.eq.s32.totalorder %s33, 0
      %p243 = por %p241, %p242
      %p244 = scmp.ne.s32.totalorder %s232, %s233
      %p245 = scmp.eq.s32.totalorder %s34, 1
      %p246 = por %p244, %p245
      %p248 = scmp.ne.s32.totalorder %s233, %s247
      %p249 = scmp.eq.s32.totalorder %s34, 0
      %p250 = por %p248, %p249
      %s252 = sadd.s32 %s251, 1
      %p255 = scmp.eq.s32.totalorder %s28, 1
      %p256 = scmp.ne.s32.totalorder %s251, %s253
      %p257 = scmp.eq.s32.totalorder %s28, 0
      %p258 = por %p256, %p257
      %p259 = scmp.ne.s32.totalorder %s251, %s253
      %p260 = scmp.eq.s32.totalorder %s33, 1
      %p261 = por %p259, %p260
      %p262 = scmp.ne.s32.totalorder %s253, %s254
      %p263 = scmp.eq.s32.totalorder %s33, 0
      %p264 = por %p262, %p263
      %p265 = scmp.ne.s32.totalorder %s253, %s254
      %p266 = scmp.eq.s32.totalorder %s34, 1
      %p267 = por %p265, %p266
      %p269 = scmp.ne.s32.totalorder %s254, %s268
      %p270 = scmp.eq.s32.totalorder %s34, 0
      %p271 = por %p269, %p270
      %s273 = sadd.s32 %s272, 1
      %p276 = scmp.eq.s32.totalorder %s28, 1
      %p277 = scmp.ne.s32.totalorder %s272, %s274
      %p278 = scmp.eq.s32.totalorder %s28, 0
      %p279 = por %p277, %p278
      %p280 = scmp.ne.s32.totalorder %s272, %s274
      %p281 = scmp.eq.s32.totalorder %s33, 1
      %p282 = por %p280, %p281
      %p283 = scmp.ne.s32.totalorder %s274, %s275
      %p284 = scmp.eq.s32.totalorder %s33, 0
      %p285 = por %p283, %p284
      %p286 = scmp.ne.s32.totalorder %s274, %s275
      %p287 = scmp.eq.s32.totalorder %s34, 1
      %p288 = por %p286, %p287
      %p290 = scmp.ne.s32.totalorder %s275, %s289
      %p291 = scmp.eq.s32.totalorder %s34, 0
      %p292 = por %p290, %p291
      %s294 = sadd.s32 %s293, 1
      %p297 = scmp.eq.s32.totalorder %s28, 1
      %p298 = scmp.ne.s32.totalorder %s293, %s295
      %p299 = scmp.eq.s32.totalorder %s28, 0
      %p300 = por %p298, %p299
      %p301 = scmp.ne.s32.totalorder %s293, %s295
      %p302 = scmp.eq.s32.totalorder %s33, 1
      %p303 = por %p301, %p302
      %p304 = scmp.ne.s32.totalorder %s295, %s296
      %p305 = scmp.eq.s32.totalorder %s33, 0
      %p306 = por %p304, %p305
      %p307 = scmp.ne.s32.totalorder %s295, %s296
      %p308 = scmp.eq.s32.totalorder %s34, 1
      %p309 = por %p307, %p308
      %p311 = scmp.ne.s32.totalorder %s296, %s310
      %p312 = scmp.eq.s32.totalorder %s34, 0
      %p313 = por %p311, %p312
      %s315 = sadd.s32 %s314, 1
      %p318 = scmp.eq.s32.totalorder %s28, 1
      %p319 = scmp.ne.s32.totalorder %s314, %s316
      %p320 = scmp.eq.s32.totalorder %s28, 0
      %p321 = por %p319, %p320
      %p322 = scmp.ne.s32.totalorder %s314, %s316
      %p323 = scmp.eq.s32.totalorder %s33, 1
      %p324 = por %p322, %p323
      %p325 = scmp.ne.s32.totalorder %s316, %s317
      %p326 = scmp.eq.s32.totalorder %s33, 0
      %p327 = por %p325, %p326
      %p328 = scmp.ne.s32.totalorder %s316, %s317
      %p329 = scmp.eq.s32.totalorder %s34, 1
      %p330 = por %p328, %p329
      %p332 = scmp.ne.s32.totalorder %s317, %s331
      %p333 = scmp.eq.s32.totalorder %s34, 0
      %p334 = por %p332, %p333
      %s335 = ssub.s32 %s28, %s35
      %p336 = scmp.eq.s32.totalorder %s335, 0
      %s338 = sadd.s32 %s337, 1
      %s339 = scalar_select %p336, %s337, %s338
      %p342 = pneg %p336
      %p343 = scmp.eq.s32.totalorder %s28, 1
      %p344 = por %p342, %p343
      %p345 = scmp.ne.s32.totalorder %s337, %s340
      %p346 = scmp.eq.s32.totalorder %s28, 0
      %p347 = por %p345, %p346
      %p348 = scmp.ne.s32.totalorder %s337, %s340
      %p349 = scmp.eq.s32.totalorder %s33, 1
      %p350 = por %p348, %p349
      %p351 = scmp.ne.s32.totalorder %s340, %s341
      %p352 = scmp.eq.s32.totalorder %s33, 0
      %p353 = por %p351, %p352
      %p354 = scmp.ne.s32.totalorder %s340, %s341
      %p355 = scmp.eq.s32.totalorder %s34, 1
      %p356 = por %p354, %p355
      %p358 = scmp.ne.s32.totalorder %s341, %s357
      %p359 = scmp.eq.s32.totalorder %s34, 0
      %p360 = por %p358, %p359
      %s361 = ssub.s32 %s28, %s35
      %p362 = scmp.eq.s32.totalorder %s361, 0
      %s364 = sadd.s32 %s363, 1
      %s365 = scalar_select %p362, %s363, %s364
      %p368 = pneg %p362
      %p369 = scmp.eq.s32.totalorder %s28, 1
      %p370 = por %p368, %p369
      %p371 = scmp.ne.s32.totalorder %s363, %s366
      %p372 = scmp.eq.s32.totalorder %s28, 0
      %p373 = por %p371, %p372
      %p374 = scmp.ne.s32.totalorder %s363, %s366
      %p375 = scmp.eq.s32.totalorder %s33, 1
      %p376 = por %p374, %p375
      %p377 = scmp.ne.s32.totalorder %s366, %s367
      %p378 = scmp.eq.s32.totalorder %s33, 0
      %p379 = por %p377, %p378
      %p380 = scmp.ne.s32.totalorder %s366, %s367
      %p381 = scmp.eq.s32.totalorder %s34, 1
      %p382 = por %p380, %p381
      %p384 = scmp.ne.s32.totalorder %s367, %s383
      %p385 = scmp.eq.s32.totalorder %s34, 0
      %p386 = por %p384, %p385
      %p387 = scmp.le.s32.totalorder 1, %s28
      %p388 = scmp.lt.s32.totalorder %s28, 3
      %p389 = pnand %p387, %p388
      %p390 = pneg %p389
      // Predicated region
      $region9: #{tpu_custom_call.1} parent=5 // pred_check
        _
      $region10: #{tpu_custom_call.1} parent=5 // pred_check_branch
        %392 = sbr.rel (%p389) target = $region12
      $region11: #{tpu_custom_call.1} parent=5 // pred_region
        %s393 = ssub.s32 %s28, 1
        // Predicated region
        $region13: #{tpu_custom_call.1} parent=11 // pred_check
          %p394 = pneg %p75
        $region14: #{tpu_custom_call.1} parent=11 // pred_check_branch
          %396 = sbr.rel (%p394) target = $region16
        $region15: #{tpu_custom_call.1} parent=11 // pred_region
          _
        $region16: #{tpu_custom_call.1} parent=11 // pred_fallthru
          _
        // Predicated region
        $region17: #{tpu_custom_call.1} parent=11 // pred_check
          %p397 = pneg %p96
        $region18: #{tpu_custom_call.1} parent=11 // pred_check_branch
          %399 = sbr.rel (%p397) target = $region20
        $region19: #{tpu_custom_call.1} parent=11 // pred_region
          _
        $region20: #{tpu_custom_call.1} parent=11 // pred_fallthru
          _
        // Predicated region
        $region21: #{tpu_custom_call.1} parent=11 // pred_check
          %p400 = pneg %p117
        $region22: #{tpu_custom_call.1} parent=11 // pred_check_branch
          %402 = sbr.rel (%p400) target = $region24
        $region23: #{tpu_custom_call.1} parent=11 // pred_region
          _
        $region24: #{tpu_custom_call.1} parent=11 // pred_fallthru
          _
        // Predicated region
        $region25: #{tpu_custom_call.1} parent=11 // pred_check
          %p403 = pneg %p138
        $region26: #{tpu_custom_call.1} parent=11 // pred_check_branch
          %405 = sbr.rel (%p403) target = $region28
        $region27: #{tpu_custom_call.1} parent=11 // pred_region
          _
        $region28: #{tpu_custom_call.1} parent=11 // pred_fallthru
          _
        // Predicated region
        $region29: #{tpu_custom_call.1} parent=11 // pred_check
          %p406 = pneg %p159
        $region30: #{tpu_custom_call.1} parent=11 // pred_check_branch
          %408 = sbr.rel (%p406) target = $region32
        $region31: #{tpu_custom_call.1} parent=11 // pred_region
          _
        $region32: #{tpu_custom_call.1} parent=11 // pred_fallthru
          _
        // Predicated region
        $region33: #{tpu_custom_call.1} parent=11 // pred_check
          %p409 = pneg %p180
        $region34: #{tpu_custom_call.1} parent=11 // pred_check_branch
          %411 = sbr.rel (%p409) target = $region36
        $region35: #{tpu_custom_call.1} parent=11 // pred_region
          _
        $region36: #{tpu_custom_call.1} parent=11 // pred_fallthru
          _
        // Predicated region
        $region37: #{tpu_custom_call.1} parent=11 // pred_check
          %p412 = pneg %p201
        $region38: #{tpu_custom_call.1} parent=11 // pred_check_branch
          %414 = sbr.rel (%p412) target = $region40
        $region39: #{tpu_custom_call.1} parent=11 // pred_region
          _
        $region40: #{tpu_custom_call.1} parent=11 // pred_fallthru
          _
        // Predicated region
        $region41: #{tpu_custom_call.1} parent=11 // pred_check
          %p415 = pneg %p222
        $region42: #{tpu_custom_call.1} parent=11 // pred_check_branch
          %417 = sbr.rel (%p415) target = $region44
        $region43: #{tpu_custom_call.1} parent=11 // pred_region
          _
        $region44: #{tpu_custom_call.1} parent=11 // pred_fallthru
          _
        // Predicated region
        $region45: #{tpu_custom_call.1} parent=11 // pred_check
          %p418 = pneg %p243
        $region46: #{tpu_custom_call.1} parent=11 // pred_check_branch
          %420 = sbr.rel (%p418) target = $region48
        $region47: #{tpu_custom_call.1} parent=11 // pred_region
          _
        $region48: #{tpu_custom_call.1} parent=11 // pred_fallthru
          _
        // Predicated region
        $region49: #{tpu_custom_call.1} parent=11 // pred_check
          %p421 = pneg %p264
        $region50: #{tpu_custom_call.1} parent=11 // pred_check_branch
          %423 = sbr.rel (%p421) target = $region52
        $region51: #{tpu_custom_call.1} parent=11 // pred_region
          _
        $region52: #{tpu_custom_call.1} parent=11 // pred_fallthru
          _
        // Predicated region
        $region53: #{tpu_custom_call.1} parent=11 // pred_check
          %p424 = pneg %p285
        $region54: #{tpu_custom_call.1} parent=11 // pred_check_branch
          %426 = sbr.rel (%p424) target = $region56
        $region55: #{tpu_custom_call.1} parent=11 // pred_region
          _
        $region56: #{tpu_custom_call.1} parent=11 // pred_fallthru
          _
        // Predicated region
        $region57: #{tpu_custom_call.1} parent=11 // pred_check
          %p427 = pneg %p306
        $region58: #{tpu_custom_call.1} parent=11 // pred_check_branch
          %429 = sbr.rel (%p427) target = $region60
        $region59: #{tpu_custom_call.1} parent=11 // pred_region
          _
        $region60: #{tpu_custom_call.1} parent=11 // pred_fallthru
          _
        // Predicated region
        $region61: #{tpu_custom_call.1} parent=11 // pred_check
          %p430 = pneg %p327
        $region62: #{tpu_custom_call.1} parent=11 // pred_check_branch
          %432 = sbr.rel (%p430) target = $region64
        $region63: #{tpu_custom_call.1} parent=11 // pred_region
          _
        $region64: #{tpu_custom_call.1} parent=11 // pred_fallthru
          _
      $region12: #{tpu_custom_call.1} parent=5 // pred_fallthru
        _
      %p433 = scmp.lt.s32.totalorder %s28, 2
      // Predicated region
      $region65: #{tpu_custom_call.1} parent=5 // pred_check
        %p434 = pneg %p433
      $region66: #{tpu_custom_call.1} parent=5 // pred_check_branch
        %436 = sbr.rel (%p434) target = $region68
      $region67: #{tpu_custom_call.1} parent=5 // pred_region
        // Predicated region
        $region69: #{tpu_custom_call.1} parent=67 // pred_check
          %p437 = pneg %p48
        $region70: #{tpu_custom_call.1} parent=67 // pred_check_branch
          %439 = sbr.rel (%p437) target = $region72
        $region71: #{tpu_custom_call.1} parent=67 // pred_region
          %p440 = scmp.lt.s32.totalorder %s28, 1
          %s441 = scalar_select %p440, %s28, 1
          %s442 = smul.addr %s441, 4
          %s443 = scalar_lea.vmem %s0, %s442
        $region72: #{tpu_custom_call.1} parent=67 // pred_fallthru
          _
      $region68: #{tpu_custom_call.1} parent=5 // pred_fallthru
        _
      %p444 = scmp.le.s32.totalorder 1, %s28
      %p445 = scmp.lt.s32.totalorder %s28, 3
      %p446 = pnand %p444, %p445
      %p447 = pneg %p446
      // Predicated region
      $region73: #{tpu_custom_call.1} parent=5 // pred_check
        _
      $region74: #{tpu_custom_call.1} parent=5 // pred_check_branch
        %449 = sbr.rel (%p446) target = $region76
      $region75: #{tpu_custom_call.1} parent=5 // pred_region
        %s450 = ssub.s32 %s28, 1
        %p451 = scmp.lt.s32.totalorder %s33, 1
        %s452 = scalar_select %p451, %s33, 1
        %s453 = smul.addr %s452, 4
        %s454 = scalar_lea.vmem %s0, %s453
        %p455 = pneg %p54
        %p456 = pneg %p51
        %p457 = pneg %p75
        %p458 = pneg %p72
        %p459 = pneg %p96
        %p460 = pneg %p93
        %p461 = pneg %p117
        %p462 = pneg %p114
        %p463 = pneg %p138
        %p464 = pneg %p135
        %p465 = pneg %p159
        %p466 = pneg %p156
        %p467 = pneg %p180
        %p468 = pneg %p177
        %p469 = pneg %p201
        %p470 = pneg %p198
        %p471 = pneg %p222
        %p472 = pneg %p219
        %p473 = pneg %p243
        %p474 = pneg %p240
        %p475 = pneg %p264
        %p476 = pneg %p261
        %p477 = pneg %p285
        %p478 = pneg %p282
        %p479 = pneg %p306
        %p480 = pneg %p303
        %p481 = pneg %p327
        %p482 = pneg %p324
        %p483 = pneg %p353
        %p484 = pneg %p350
        %s485 = sand.u32 %s340, 1
        %s486 = scalar_lea.sflag [#allocation3], %s485
        %s487 = sand.u32 %s340, 1
        %s488 = smul.addr %s487, 4
        %s489 = scalar_lea.vmem [#allocation2], %s488
        %p490 = pneg %p379
        %p491 = pneg %p376
        %s492 = sand.u32 %s366, 1
        %s493 = scalar_lea.sflag [#allocation5], %s492
        %s494 = sand.u32 %s366, 1
        %s495 = smul.addr %s494, 8
        %s496 = scalar_lea.vmem [#allocation4], %s495
        %p497 = scmp.lt.s32.totalorder %s33, 1
        %s498 = scalar_select %p497, %s33, 1
        %s499 = smul.addr %s498, 4
        %s500 = scalar_lea.vmem %s0, %s499
        %v501 = vld [vmem:[%s500] sm:$0xf]
        %v502 = vld [vmem:[%s13] sm:$0x1]
        %v503 = vld [vmem:[%s1] sm:$0xff]
        %v504 = vld [vmem:[%s1 + $0x8] sm:$0xff]
        %v505 = vld [vmem:[%s1 + $0x10] sm:$0xff]
        %v506 = vld [vmem:[%s1 + $0x18] sm:$0xff]
        %v507 = vld [vmem:[%s2] sm:$0xff]
        %v508 = vld [vmem:[%s2 + $0x8] sm:$0xff]
        %v509 = vld [vmem:[%s2 + $0x10] sm:$0xff]
        %v510 = vld [vmem:[%s2 + $0x18] sm:$0xff]
        %512 = vset.pattern.permute.xlu0 0
        %513 = vperm.xlu0 %512, %v507
        %v514 = vpop.permute.xlu0 %513
        %517 = vset.pattern.permute.xlu0 0
        %518 = vperm.xlu0 %517, %v508
        %v519 = vpop.permute.xlu0 %518
        %522 = vset.pattern.permute.xlu0 0
        %523 = vperm.xlu0 %522, %v509
        %v524 = vpop.permute.xlu0 %523
        %527 = vset.pattern.permute.xlu0 0
        %528 = vperm.xlu0 %527, %v510
        %v529 = vpop.permute.xlu0 %528
        %vm531 = vcmask 31744
        %v533 = vsel %vm531, %v503, 0
        %v536 = vsel %vm531, %v504, 0
        %v539 = vsel %vm531, %v505, 0
        %v542 = vsel %vm531, %v506, 0
        %vm544 = vcmask 1043456
        %v546 = vsel %vm544, %v501, 0
        %548 = vmatprep.subr.mxu0 0.0
        %549 = vmatpush1.msra.mxu0 %v546
        %550 = vmatprep.subr.mxu0 0.0
        %551 = vmatpush1.msra.mxu0 0.0
        %552 = vmatprep.subr.mxu0 0.0
        %553 = vmatpush1.msra.mxu0 0.0
        %554 = vmatprep.subr.mxu0 0.0
        %555 = vmatpush1.msra.mxu0 0.0
        %556 = vmatprep.subr.mxu0 0.0
        %557 = vmatpush1.msra.mxu0 0.0
        %558 = vmatprep.subr.mxu0 0.0
        %559 = vmatpush1.msra.mxu0 0.0
        %560 = vmatprep.subr.mxu0 0.0
        %561 = vmatpush1.msra.mxu0 0.0
        %562 = vmatprep.subr.mxu0 0.0
        %563 = vmatpush1.msra.mxu0 0.0
        %564 = vmatprep.subr.mxu0 0.0
        %565 = vmatpush1.msra.mxu0 0.0
        %566 = vmatprep.subr.mxu0 0.0
        %567 = vmatpush1.msra.mxu0 0.0
        %568 = vmatprep.subr.mxu0 0.0
        %569 = vmatpush1.msra.mxu0 0.0
        %570 = vmatprep.subr.mxu0 0.0
        %571 = vmatpush1.msra.mxu0 0.0
        %572 = vmatprep.subr.mxu0 0.0
        %573 = vmatpush1.msra.mxu0 0.0
        %574 = vmatprep.subr.mxu0 0.0
        %575 = vmatpush1.msra.mxu0 0.0
        %576 = vmatprep.subr.mxu0 0.0
        %577 = vmatpush1.msra.mxu0 0.0
        %578 = vmatprep.subr.mxu0 0.0
        %579 = vmatpush1.msra.mxu0 0.0
        %580 = vmatprep.subr.mxu0 0.0
        %581 = vmatpush1.msra.mxu0 0.0
        %582 = vmatprep.subr.mxu0 0.0
        %583 = vmatpush1.msra.mxu0 0.0
        %584 = vmatprep.subr.mxu0 0.0
        %585 = vmatpush1.msra.mxu0 0.0
        %586 = vmatprep.subr.mxu0 0.0
        %587 = vmatpush1.msra.mxu0 0.0
        %588 = vmatprep.subr.mxu0 0.0
        %589 = vmatpush1.msra.mxu0 0.0
        %590 = vmatprep.subr.mxu0 0.0
        %591 = vmatpush1.msra.mxu0 0.0
        %592 = vmatprep.subr.mxu0 0.0
        %593 = vmatpush1.msra.mxu0 0.0
        %594 = vmatprep.subr.mxu0 0.0
        %595 = vmatpush1.msra.mxu0 0.0
        %596 = vmatprep.subr.mxu0 0.0
        %597 = vmatpush1.msra.mxu0 0.0
        %598 = vmatprep.subr.mxu0 0.0
        %599 = vmatpush1.msra.mxu0 0.0
        %600 = vmatprep.subr.mxu0 0.0
        %601 = vmatpush1.msra.mxu0 0.0
        %602 = vmatprep.subr.mxu0 0.0
        %603 = vmatpush1.msra.mxu0 0.0
        %604 = vmatprep.subr.mxu0 0.0
        %605 = vmatpush1.msra.mxu0 0.0
        %606 = vmatprep.subr.mxu0 0.0
        %607 = vmatpush1.msra.mxu0 0.0
        %608 = vmatprep.subr.mxu0 0.0
        %609 = vmatpush1.msra.mxu0 0.0
        %610 = vmatprep.subr.mxu0 0.0
        %611 = vmatpush1.msra.mxu0 0.0
        %612 = vmatprep.mubr.f32.mxu0 0.0
        %613 = vmatmul.mubr.f32.gmra.mrb[0].mxu0 %v533
        %v614 = vpop.f32.mrb[0].mxu0
        %v615 = vadd.f32 %v514, %v614
        %v616 = vpop.f32.mrb[0].mxu0
        %617 = vmatprep.mubr.f32.mxu0 0.0
        %618 = vmatmul.mubr.f32.gmra.mrb[0].mxu0 %v536
        %v619 = vpop.f32.mrb[0].mxu0
        %v620 = vadd.f32 %v519, %v619
        %v621 = vpop.f32.mrb[0].mxu0
        %622 = vmatprep.mubr.f32.mxu0 0.0
        %623 = vmatmul.mubr.f32.gmra.mrb[0].mxu0 %v539
        %v624 = vpop.f32.mrb[0].mxu0
        %v625 = vadd.f32 %v524, %v624
        %v626 = vpop.f32.mrb[0].mxu0
        %627 = vmatprep.mubr.f32.mxu0 0.0
        %628 = vmatmul.mubr.f32.gmra.mrb[0].mxu0 %v542
        %v629 = vpop.f32.mrb[0].mxu0
        %v630 = vadd.f32 %v529, %v629
        %v631 = vpop.f32.mrb[0].mxu0
        %632 = vdwg.mxu0
        %vm633 = vcmp.ge.f32.partialorder %v615, 0.0
        %vm634 = vcmp.ge.f32.partialorder %v620, 0.0
        %vm635 = vcmp.ge.f32.partialorder %v625, 0.0
        %vm636 = vcmp.ge.f32.partialorder %v630, 0.0
        %v638 = vlaneseq
        %v639 = vshrl.u32 %v638, 7
        %v640 = vsub.s32 0, %v639
        %v641 = vrot.slane %v502, %v640
        %642 = vset.pattern.permute.xlu0 0
        %643 = vperm.xlu0 %642, %v641
        %v644 = vpop.permute.xlu0 %643
        %v646 = vmul.f32 %v644, %v615
        %v647 = vmul.f32 %v644, %v620
        %v648 = vmul.f32 %v644, %v625
        %v649 = vmul.f32 %v644, %v630
        %v650 = vsel %vm633, %v615, %v646
        %v651 = vsel %vm634, %v620, %v647
        %v652 = vsel %vm635, %v625, %v648
        %v653 = vsel %vm636, %v630, %v649
        %v654 = vld [vmem:[%s3] sm:$0xff]
        %v655 = vld [vmem:[%s3 + $0x8] sm:$0xff]
        %v656 = vld [vmem:[%s3 + $0x10] sm:$0xff]
        %v657 = vld [vmem:[%s3 + $0x18] sm:$0xff]
        %v658 = vld [vmem:[%s4] sm:$0xff]
        %v659 = vld [vmem:[%s4 + $0x8] sm:$0xff]
        %v660 = vld [vmem:[%s4 + $0x10] sm:$0xff]
        %v661 = vld [vmem:[%s4 + $0x18] sm:$0xff]
        %vm662 = vcmask 130048
        %v663 = vsel %vm662, %v650, 0.0
        %v664 = vsel %vm662, %v651, 0.0
        %v665 = vadd.f32 %v663, %v664
        %v666 = vsel %vm662, %v652, 0.0
        %v667 = vadd.f32 %v665, %v666
        %v668 = vsel %vm662, %v653, 0.0
        %v669 = vadd.f32 %v667, %v668
        %670 = vadd.xlane.f32.xlu0 %v669
        %v671 = vpop.xlane.xlu0 %670
        %v672 = vrot.slane %v671, 4
        %v673 = vadd.f32 %v671, %v672
        %v674 = vrot.slane %v673, 2
        %v675 = vadd.f32 %v673, %v674
        %v676 = vrot.slane %v675, 1
        %v677 = vadd.f32 %v675, %v676
        %s678 = vtos %v677
        %v679 = vstv %s678
        %v680 = vrcp.pop 512.0
        %v681 = vmul.f32 %v679, %v680
        %v682 = vsub.f32 %v650, %v681
        %v683 = vsub.f32 %v651, %v681
        %v684 = vsub.f32 %v652, %v681
        %v685 = vsub.f32 %v653, %v681
        %v686 = vmul.f32 %v682, %v682
        %v687 = vmul.f32 %v683, %v683
        %v688 = vmul.f32 %v684, %v684
        %v689 = vmul.f32 %v685, %v685
        %v690 = vsel %vm662, %v686, 0.0
        %v691 = vsel %vm662, %v687, 0.0
        %v692 = vadd.f32 %v690, %v691
        %v693 = vsel %vm662, %v688, 0.0
        %v694 = vadd.f32 %v692, %v693
        %v695 = vsel %vm662, %v689, 0.0
        %v696 = vadd.f32 %v694, %v695
        %697 = vadd.xlane.f32.xlu0 %v696
        %v698 = vpop.xlane.xlu0 %697
        %v699 = vrot.slane %v698, 4
        %v700 = vadd.f32 %v698, %v699
        %v701 = vrot.slane %v700, 2
        %v702 = vadd.f32 %v700, %v701
        %v703 = vrot.slane %v702, 1
        %v704 = vadd.f32 %v702, %v703
        %s705 = vtos %v704
        %v706 = vstv %s705
        %v707 = vmul.f32 %v706, %v680
        %v708 = vadd.f32 %v707, 1e-05
        %v709 = vrsqrt.pop %v708
        %v710 = vmul.f32 %v682, %v709
        %v711 = vmul.f32 %v683, %v709
        %v712 = vmul.f32 %v684, %v709
        %v713 = vmul.f32 %v685, %v709
        %715 = vset.pattern.permute.xlu0 0
        %716 = vperm.xlu0 %715, %v654
        %v717 = vpop.permute.xlu0 %716
        %720 = vset.pattern.permute.xlu0 0
        %721 = vperm.xlu0 %720, %v655
        %v722 = vpop.permute.xlu0 %721
        %725 = vset.pattern.permute.xlu0 0
        %726 = vperm.xlu0 %725, %v656
        %v727 = vpop.permute.xlu0 %726
        %730 = vset.pattern.permute.xlu0 0
        %731 = vperm.xlu0 %730, %v657
        %v732 = vpop.permute.xlu0 %731
        %v734 = vmul.f32 %v710, %v717
        %v735 = vmul.f32 %v711, %v722
        %v736 = vmul.f32 %v712, %v727
        %v737 = vmul.f32 %v713, %v732
        %739 = vset.pattern.permute.xlu0 0
        %740 = vperm.xlu0 %739, %v658
        %v741 = vpop.permute.xlu0 %740
        %744 = vset.pattern.permute.xlu0 0
        %745 = vperm.xlu0 %744, %v659
        %v746 = vpop.permute.xlu0 %745
        %749 = vset.pattern.permute.xlu0 0
        %750 = vperm.xlu0 %749, %v660
        %v751 = vpop.permute.xlu0 %750
        %754 = vset.pattern.permute.xlu0 0
        %755 = vperm.xlu0 %754, %v661
        %v756 = vpop.permute.xlu0 %755
        %v758 = vadd.f32 %v734, %v741
        %v759 = vadd.f32 %v735, %v746
        %v760 = vadd.f32 %v736, %v751
        %v761 = vadd.f32 %v737, %v756
        %766 = vrot.lane.b32.xlu0 %v758, 2
        %v767 = vpop.permute.xlu0 %766
        %768 = vrot.lane.b32.xlu0 %v759, 2
        %v769 = vpop.permute.xlu0 %768
        %770 = vrot.lane.b32.xlu0 %v760, 2
        %v771 = vpop.permute.xlu0 %770
        %772 = vrot.lane.b32.xlu0 %v761, 2
        %v773 = vpop.permute.xlu0 %772
        %vm778 = vcmask 15360
        %v779 = vsel %vm778, 0.0, %v767
        %v780 = vsel %vm778, 0.0, %v769
        %v781 = vsel %vm778, 0.0, %v771
        %v782 = vsel %vm778, 0.0, %v773
        %vm783 = vcmask 146432
        %v784 = vsel %vm783, %v779, 0.0
        %v785 = vsel %vm783, %v780, 0.0
        %v786 = vsel %vm783, %v781, 0.0
        %v787 = vsel %vm783, %v782, 0.0
        %v788 = vld [vmem:[%s5] sm:$0xff]
        %v789 = vld [vmem:[%s5 + $0x8] sm:$0xff]
        %v790 = vld [vmem:[%s5 + $0x10] sm:$0xff]
        %v791 = vld [vmem:[%s5 + $0x18] sm:$0xff]
        %793 = vset.pattern.permute.xlu0 0
        %794 = vperm.xlu0 %793, %v788
        %v795 = vpop.permute.xlu0 %794
        %798 = vset.pattern.permute.xlu0 0
        %799 = vperm.xlu0 %798, %v789
        %v800 = vpop.permute.xlu0 %799
        %803 = vset.pattern.permute.xlu0 0
        %804 = vperm.xlu0 %803, %v790
        %v805 = vpop.permute.xlu0 %804
        %808 = vset.pattern.permute.xlu0 0
        %809 = vperm.xlu0 %808, %v791
        %v810 = vpop.permute.xlu0 %809
        %v812 = vmul.f32 %v795, %v784
        %v813 = vmul.f32 %v800, %v785
        %v814 = vmul.f32 %v805, %v786
        %v815 = vmul.f32 %v810, %v787
        %816 = vset.pattern.permute.xlu0 1
        %817 = vperm.xlu0 %816, %v788
        %v818 = vpop.permute.xlu0 %817
        %820 = vset.pattern.permute.xlu0 1
        %821 = vperm.xlu0 %820, %v789
        %v822 = vpop.permute.xlu0 %821
        %824 = vset.pattern.permute.xlu0 1
        %825 = vperm.xlu0 %824, %v790
        %v826 = vpop.permute.xlu0 %825
        %828 = vset.pattern.permute.xlu0 1
        %829 = vperm.xlu0 %828, %v791
        %v830 = vpop.permute.xlu0 %829
        %v832 = vmul.f32 %v818, %v784
        %v833 = vmul.f32 %v822, %v785
        %v834 = vmul.f32 %v826, %v786
        %v835 = vmul.f32 %v830, %v787
        %840 = vrot.lane.b32.xlu0 %v832, 126
        %v841 = vpop.permute.xlu0 %840
        %842 = vrot.lane.b32.xlu0 %v833, 126
        %v843 = vpop.permute.xlu0 %842
        %844 = vrot.lane.b32.xlu0 %v834, 126
        %v845 = vpop.permute.xlu0 %844
        %846 = vrot.lane.b32.xlu0 %v835, 126
        %v847 = vpop.permute.xlu0 %846
        %v852 = vadd.f32 %v812, %v841
        %v853 = vadd.f32 %v813, %v843
        %v854 = vadd.f32 %v814, %v845
        %v855 = vadd.f32 %v815, %v847
        %856 = vset.pattern.permute.xlu0 2
        %857 = vperm.xlu0 %856, %v788
        %v858 = vpop.permute.xlu0 %857
        %860 = vset.pattern.permute.xlu0 2
        %861 = vperm.xlu0 %860, %v789
        %v862 = vpop.permute.xlu0 %861
        %864 = vset.pattern.permute.xlu0 2
        %865 = vperm.xlu0 %864, %v790
        %v866 = vpop.permute.xlu0 %865
        %868 = vset.pattern.permute.xlu0 2
        %869 = vperm.xlu0 %868, %v791
        %v870 = vpop.permute.xlu0 %869
        %v872 = vmul.f32 %v858, %v784
        %v873 = vmul.f32 %v862, %v785
        %v874 = vmul.f32 %v866, %v786
        %v875 = vmul.f32 %v870, %v787
        %880 = vrot.lane.b32.xlu0 %v872, 124
        %v881 = vpop.permute.xlu0 %880
        %882 = vrot.lane.b32.xlu0 %v873, 124
        %v883 = vpop.permute.xlu0 %882
        %884 = vrot.lane.b32.xlu0 %v874, 124
        %v885 = vpop.permute.xlu0 %884
        %886 = vrot.lane.b32.xlu0 %v875, 124
        %v887 = vpop.permute.xlu0 %886
        %v892 = vadd.f32 %v852, %v881
        %v893 = vadd.f32 %v853, %v883
        %v894 = vadd.f32 %v854, %v885
        %v895 = vadd.f32 %v855, %v887
        %v896 = vld [vmem:[%s6] sm:$0xff]
        %v897 = vld [vmem:[%s6 + $0x8] sm:$0xff]
        %v898 = vld [vmem:[%s6 + $0x10] sm:$0xff]
        %v899 = vld [vmem:[%s6 + $0x18] sm:$0xff]
        %901 = vset.pattern.permute.xlu0 0
        %902 = vperm.xlu0 %901, %v896
        %v903 = vpop.permute.xlu0 %902
        %906 = vset.pattern.permute.xlu0 0
        %907 = vperm.xlu0 %906, %v897
        %v908 = vpop.permute.xlu0 %907
        %911 = vset.pattern.permute.xlu0 0
        %912 = vperm.xlu0 %911, %v898
        %v913 = vpop.permute.xlu0 %912
        %916 = vset.pattern.permute.xlu0 0
        %917 = vperm.xlu0 %916, %v899
        %v918 = vpop.permute.xlu0 %917
        %v920 = vadd.f32 %v892, %v903
        %v921 = vadd.f32 %v893, %v908
        %v922 = vadd.f32 %v894, %v913
        %v923 = vadd.f32 %v895, %v918
        %vm924 = vcmp.ge.f32.partialorder %v920, 0.0
        %vm925 = vcmp.ge.f32.partialorder %v921, 0.0
        %vm926 = vcmp.ge.f32.partialorder %v922, 0.0
        %vm927 = vcmp.ge.f32.partialorder %v923, 0.0
        %928 = vset.pattern.permute.xlu0 1
        %929 = vperm.xlu0 %928, %v641
        %v930 = vpop.permute.xlu0 %929
        %v932 = vmul.f32 %v930, %v920
        %v933 = vmul.f32 %v930, %v921
        %v934 = vmul.f32 %v930, %v922
        %v935 = vmul.f32 %v930, %v923
        %v936 = vsel %vm924, %v920, %v932
        %v937 = vsel %vm925, %v921, %v933
        %v938 = vsel %vm926, %v922, %v934
        %v939 = vsel %vm927, %v923, %v935
        %v940 = vld [vmem:[%s7] sm:$0xff]
        %v941 = vld [vmem:[%s7 + $0x8] sm:$0xff]
        %v942 = vld [vmem:[%s7 + $0x10] sm:$0xff]
        %v943 = vld [vmem:[%s7 + $0x18] sm:$0xff]
        %v944 = vld [vmem:[%s8] sm:$0xff]
        %v945 = vld [vmem:[%s8 + $0x8] sm:$0xff]
        %v946 = vld [vmem:[%s8 + $0x10] sm:$0xff]
        %v947 = vld [vmem:[%s8 + $0x18] sm:$0xff]
        %v948 = vsel %vm662, %v936, 0.0
        %v949 = vsel %vm662, %v937, 0.0
        %v950 = vadd.f32 %v948, %v949
        %v951 = vsel %vm662, %v938, 0.0
        %v952 = vadd.f32 %v950, %v951
        %v953 = vsel %vm662, %v939, 0.0
        %v954 = vadd.f32 %v952, %v953
        %955 = vadd.xlane.f32.xlu0 %v954
        %v956 = vpop.xlane.xlu0 %955
        %v957 = vrot.slane %v956, 4
        %v958 = vadd.f32 %v956, %v957
        %v959 = vrot.slane %v958, 2
        %v960 = vadd.f32 %v958, %v959
        %v961 = vrot.slane %v960, 1
        %v962 = vadd.f32 %v960, %v961
        %s963 = vtos %v962
        %v964 = vstv %s963
        %v965 = vmul.f32 %v964, %v680
        %v966 = vsub.f32 %v936, %v965
        %v967 = vsub.f32 %v937, %v965
        %v968 = vsub.f32 %v938, %v965
        %v969 = vsub.f32 %v939, %v965
        %v970 = vmul.f32 %v966, %v966
        %v971 = vmul.f32 %v967, %v967
        %v972 = vmul.f32 %v968, %v968
        %v973 = vmul.f32 %v969, %v969
        %v974 = vsel %vm662, %v970, 0.0
        %v975 = vsel %vm662, %v971, 0.0
        %v976 = vadd.f32 %v974, %v975
        %v977 = vsel %vm662, %v972, 0.0
        %v978 = vadd.f32 %v976, %v977
        %v979 = vsel %vm662, %v973, 0.0
        %v980 = vadd.f32 %v978, %v979
        %981 = vadd.xlane.f32.xlu0 %v980
        %v982 = vpop.xlane.xlu0 %981
        %v983 = vrot.slane %v982, 4
        %v984 = vadd.f32 %v982, %v983
        %v985 = vrot.slane %v984, 2
        %v986 = vadd.f32 %v984, %v985
        %v987 = vrot.slane %v986, 1
        %v988 = vadd.f32 %v986, %v987
        %s989 = vtos %v988
        %v990 = vstv %s989
        %v991 = vmul.f32 %v990, %v680
        %v992 = vadd.f32 %v991, 1e-05
        %v993 = vrsqrt.pop %v992
        %v994 = vmul.f32 %v966, %v993
        %v995 = vmul.f32 %v967, %v993
        %v996 = vmul.f32 %v968, %v993
        %v997 = vmul.f32 %v969, %v993
        %999 = vset.pattern.permute.xlu0 0
        %1000 = vperm.xlu0 %999, %v940
        %v1001 = vpop.permute.xlu0 %1000
        %1004 = vset.pattern.permute.xlu0 0
        %1005 = vperm.xlu0 %1004, %v941
        %v1006 = vpop.permute.xlu0 %1005
        %1009 = vset.pattern.permute.xlu0 0
        %1010 = vperm.xlu0 %1009, %v942
        %v1011 = vpop.permute.xlu0 %1010
        %1014 = vset.pattern.permute.xlu0 0
        %1015 = vperm.xlu0 %1014, %v943
        %v1016 = vpop.permute.xlu0 %1015
        %v1018 = vmul.f32 %v994, %v1001
        %v1019 = vmul.f32 %v995, %v1006
        %v1020 = vmul.f32 %v996, %v1011
        %v1021 = vmul.f32 %v997, %v1016
        %1023 = vset.pattern.permute.xlu0 0
        %1024 = vperm.xlu0 %1023, %v944
        %v1025 = vpop.permute.xlu0 %1024
        %1028 = vset.pattern.permute.xlu0 0
        %1029 = vperm.xlu0 %1028, %v945
        %v1030 = vpop.permute.xlu0 %1029
        %1033 = vset.pattern.permute.xlu0 0
        %1034 = vperm.xlu0 %1033, %v946
        %v1035 = vpop.permute.xlu0 %1034
        %1038 = vset.pattern.permute.xlu0 0
        %1039 = vperm.xlu0 %1038, %v947
        %v1040 = vpop.permute.xlu0 %1039
        %v1042 = vadd.f32 %v1018, %v1025
        %v1043 = vadd.f32 %v1019, %v1030
        %v1044 = vadd.f32 %v1020, %v1035
        %v1045 = vadd.f32 %v1021, %v1040
        %v1046 = vld [vmem:[%s9] sm:$0xf]
        %v1047 = vld [vmem:[%s10] sm:$0xf]
        %1049 = vset.pattern.permute.xlu0 0
        %1050 = vperm.xlu0 %1049, %v1047
        %v1051 = vpop.permute.xlu0 %1050
        %vm1053 = vcmask 261120
        %v1055 = vsel %vm1053, %v1046, 0
        %1057 = vmatprep.subr.mxu0 0.0
        %1058 = vmatpush1.msra.mxu0 %v1042
        %1059 = vmatprep.subr.mxu0 0.0
        %1060 = vmatpush1.msra.mxu0 %v1043
        %1061 = vmatprep.subr.mxu0 0.0
        %1062 = vmatpush1.msra.mxu0 %v1044
        %1063 = vmatprep.subr.mxu0 0.0
        %1064 = vmatpush1.msra.mxu0 %v1045
        %1065 = vmatprep.subr.mxu0 0.0
        %1066 = vmatpush1.msra.mxu0 0.0
        %1067 = vmatprep.subr.mxu0 0.0
        %1068 = vmatpush1.msra.mxu0 0.0
        %1069 = vmatprep.subr.mxu0 0.0
        %1070 = vmatpush1.msra.mxu0 0.0
        %1071 = vmatprep.subr.mxu0 0.0
        %1072 = vmatpush1.msra.mxu0 0.0
        %1073 = vmatprep.subr.mxu0 0.0
        %1074 = vmatpush1.msra.mxu0 0.0
        %1075 = vmatprep.subr.mxu0 0.0
        %1076 = vmatpush1.msra.mxu0 0.0
        %1077 = vmatprep.subr.mxu0 0.0
        %1078 = vmatpush1.msra.mxu0 0.0
        %1079 = vmatprep.subr.mxu0 0.0
        %1080 = vmatpush1.msra.mxu0 0.0
        %1081 = vmatprep.subr.mxu0 0.0
        %1082 = vmatpush1.msra.mxu0 0.0
        %1083 = vmatprep.subr.mxu0 0.0
        %1084 = vmatpush1.msra.mxu0 0.0
        %1085 = vmatprep.subr.mxu0 0.0
        %1086 = vmatpush1.msra.mxu0 0.0
        %1087 = vmatprep.subr.mxu0 0.0
        %1088 = vmatpush1.msra.mxu0 0.0
        %1089 = vmatprep.subr.mxu0 0.0
        %1090 = vmatpush1.msra.mxu0 0.0
        %1091 = vmatprep.subr.mxu0 0.0
        %1092 = vmatpush1.msra.mxu0 0.0
        %1093 = vmatprep.subr.mxu0 0.0
        %1094 = vmatpush1.msra.mxu0 0.0
        %1095 = vmatprep.subr.mxu0 0.0
        %1096 = vmatpush1.msra.mxu0 0.0
        %1097 = vmatprep.subr.mxu0 0.0
        %1098 = vmatpush1.msra.mxu0 0.0
        %1099 = vmatprep.subr.mxu0 0.0
        %1100 = vmatpush1.msra.mxu0 0.0
        %1101 = vmatprep.subr.mxu0 0.0
        %1102 = vmatpush1.msra.mxu0 0.0
        %1103 = vmatprep.subr.mxu0 0.0
        %1104 = vmatpush1.msra.mxu0 0.0
        %1105 = vmatprep.subr.mxu0 0.0
        %1106 = vmatpush1.msra.mxu0 0.0
        %1107 = vmatprep.subr.mxu0 0.0
        %1108 = vmatpush1.msra.mxu0 0.0
        %1109 = vmatprep.subr.mxu0 0.0
        %1110 = vmatpush1.msra.mxu0 0.0
        %1111 = vmatprep.subr.mxu0 0.0
        %1112 = vmatpush1.msra.mxu0 0.0
        %1113 = vmatprep.subr.mxu0 0.0
        %1114 = vmatpush1.msra.mxu0 0.0
        %1115 = vmatprep.subr.mxu0 0.0
        %1116 = vmatpush1.msra.mxu0 0.0
        %1117 = vmatprep.subr.mxu0 0.0
        %1118 = vmatpush1.msra.mxu0 0.0
        %1119 = vmatprep.subr.mxu0 0.0
        %1120 = vmatpush1.msra.mxu0 0.0
        %1121 = vmatprep.mubr.f32.mxu0 0.0
        %1122 = vmatmul.mubr.f32.gmra.mrb[0].mxu0 %v1055
        %v1123 = vpop.f32.mrb[0].mxu0
        %v1124 = vadd.f32 %v1051, %v1123
        %v1125 = vpop.f32.mrb[0].mxu0
        %1126 = vdwg.mxu0
        %v1127 = vadd.f32 %v501, %v1124
        %vm1128 = vcmask 125952
        %1129 = vst.msk [vmem:[%s489] sm:$0xf] %vm1128, %v1127
        %v1130 = vld [vmem:[%s11] sm:$0xff]
        %v1131 = vld [vmem:[%s12] sm:$0xff]
        %1133 = vset.pattern.permute.xlu0 0
        %1134 = vperm.xlu0 %1133, %v1131
        %v1135 = vpop.permute.xlu0 %1134
        %v1138 = vsel %vm1053, %v1130, 0
        %1140 = vmatprep.subr.mxu0 0.0
        %1141 = vmatpush1.msra.mxu0 %v1042
        %1142 = vmatprep.subr.mxu0 0.0
        %1143 = vmatpush1.msra.mxu0 %v1043
        %1144 = vmatprep.subr.mxu0 0.0
        %1145 = vmatpush1.msra.mxu0 %v1044
        %1146 = vmatprep.subr.mxu0 0.0
        %1147 = vmatpush1.msra.mxu0 %v1045
        %1148 = vmatprep.subr.mxu0 0.0
        %1149 = vmatpush1.msra.mxu0 0.0
        %1150 = vmatprep.subr.mxu0 0.0
        %1151 = vmatpush1.msra.mxu0 0.0
        %1152 = vmatprep.subr.mxu0 0.0
        %1153 = vmatpush1.msra.mxu0 0.0
        %1154 = vmatprep.subr.mxu0 0.0
        %1155 = vmatpush1.msra.mxu0 0.0
        %1156 = vmatprep.subr.mxu0 0.0
        %1157 = vmatpush1.msra.mxu0 0.0
        %1158 = vmatprep.subr.mxu0 0.0
        %1159 = vmatpush1.msra.mxu0 0.0
        %1160 = vmatprep.subr.mxu0 0.0
        %1161 = vmatpush1.msra.mxu0 0.0
        %1162 = vmatprep.subr.mxu0 0.0
        %1163 = vmatpush1.msra.mxu0 0.0
        %1164 = vmatprep.subr.mxu0 0.0
        %1165 = vmatpush1.msra.mxu0 0.0
        %1166 = vmatprep.subr.mxu0 0.0
        %1167 = vmatpush1.msra.mxu0 0.0
        %1168 = vmatprep.subr.mxu0 0.0
        %1169 = vmatpush1.msra.mxu0 0.0
        %1170 = vmatprep.subr.mxu0 0.0
        %1171 = vmatpush1.msra.mxu0 0.0
        %1172 = vmatprep.subr.mxu0 0.0
        %1173 = vmatpush1.msra.mxu0 0.0
        %1174 = vmatprep.subr.mxu0 0.0
        %1175 = vmatpush1.msra.mxu0 0.0
        %1176 = vmatprep.subr.mxu0 0.0
        %1177 = vmatpush1.msra.mxu0 0.0
        %1178 = vmatprep.subr.mxu0 0.0
        %1179 = vmatpush1.msra.mxu0 0.0
        %1180 = vmatprep.subr.mxu0 0.0
        %1181 = vmatpush1.msra.mxu0 0.0
        %1182 = vmatprep.subr.mxu0 0.0
        %1183 = vmatpush1.msra.mxu0 0.0
        %1184 = vmatprep.subr.mxu0 0.0
        %1185 = vmatpush1.msra.mxu0 0.0
        %1186 = vmatprep.subr.mxu0 0.0
        %1187 = vmatpush1.msra.mxu0 0.0
        %1188 = vmatprep.subr.mxu0 0.0
        %1189 = vmatpush1.msra.mxu0 0.0
        %1190 = vmatprep.subr.mxu0 0.0
        %1191 = vmatpush1.msra.mxu0 0.0
        %1192 = vmatprep.subr.mxu0 0.0
        %1193 = vmatpush1.msra.mxu0 0.0
        %1194 = vmatprep.subr.mxu0 0.0
        %1195 = vmatpush1.msra.mxu0 0.0
        %1196 = vmatprep.subr.mxu0 0.0
        %1197 = vmatpush1.msra.mxu0 0.0
        %1198 = vmatprep.subr.mxu0 0.0
        %1199 = vmatpush1.msra.mxu0 0.0
        %1200 = vmatprep.subr.mxu0 0.0
        %1201 = vmatpush1.msra.mxu0 0.0
        %1202 = vmatprep.subr.mxu0 0.0
        %1203 = vmatpush1.msra.mxu0 0.0
        %1204 = vmatprep.mubr.f32.mxu0 0.0
        %1205 = vmatmul.mubr.f32.gmra.mrb[0].mxu0 %v1138
        %v1206 = vpop.f32.mrb[0].mxu0
        %v1207 = vadd.f32 %v1135, %v1206
        %v1208 = vpop.f32.mrb[0].mxu0
        %1209 = vdwg.mxu0
        %1210 = vst.msk [vmem:[%s496] sm:$0xff] %vm662, %v1207
        %s1211 = sand.u32 %s340, 1
        %s1212 = scalar_lea.sflag [#allocation3], %s1211
        %s1213 = sand.u32 %s340, 1
        %s1214 = smul.addr %s1213, 4
        %s1215 = scalar_lea.vmem [#allocation2], %s1214
        %s1216 = sand.u32 %s366, 1
        %s1217 = scalar_lea.sflag [#allocation5], %s1216
        %s1218 = sand.u32 %s366, 1
        %s1219 = smul.addr %s1218, 8
        %s1220 = scalar_lea.vmem [#allocation4], %s1219
        // Predicated region
        $region77: #{tpu_custom_call.1} parent=75 // pred_check
          %p1221 = pneg %p350
        $region78: #{tpu_custom_call.1} parent=75 // pred_check_branch
          %1223 = sbr.rel (%p1221) target = $region80
        $region79: #{tpu_custom_call.1} parent=75 // pred_region
          %s1225 = ssub.s32 64, 64
          %1226 = vsyncadd %s1212, %s1225
          %s1227 = smul.addr %s33, 64
          %s1228 = scalar_lea.hbm %s14, %s1227
          %s1230 = sshll.u32 %s1215, 4
          %s1231 = int_to_ptr.vmem [resolvable:$true] %s1230
          %1233 = dma.vmem_to_hbm [thread:$0]  %s1231, 64, %s1228, %s1212
        $region80: #{tpu_custom_call.1} parent=75 // pred_fallthru
          _
        // Predicated region
        $region81: #{tpu_custom_call.1} parent=75 // pred_check
          %p1234 = pneg %p376
        $region82: #{tpu_custom_call.1} parent=75 // pred_check_branch
          %1236 = sbr.rel (%p1234) target = $region84
        $region83: #{tpu_custom_call.1} parent=75 // pred_region
          %s1238 = ssub.s32 128, 128
          %1239 = vsyncadd %s1217, %s1238
          %s1240 = smul.addr %s33, 128
          %s1241 = scalar_lea.hbm %s15, %s1240
          %s1243 = sshll.u32 %s1220, 4
          %s1244 = int_to_ptr.vmem [resolvable:$true] %s1243
          %1246 = dma.vmem_to_hbm [thread:$0]  %s1244, 128, %s1241, %s1217
        $region84: #{tpu_custom_call.1} parent=75 // pred_fallthru
          _
      $region76: #{tpu_custom_call.1} parent=5 // pred_fallthru
        _
      %p1247 = scmp.le.s32.totalorder 2, %s28
      // Predicated region
      $region85: #{tpu_custom_call.1} parent=5 // pred_check
        %p1248 = pneg %p1247
      $region86: #{tpu_custom_call.1} parent=5 // pred_check_branch
        %1250 = sbr.rel (%p1248) target = $region88
      $region87: #{tpu_custom_call.1} parent=5 // pred_region
        %s1251 = ssub.s32 %s28, 2
        // Predicated region
        $region89: #{tpu_custom_call.1} parent=87 // pred_check
          %p1252 = pneg %p356
        $region90: #{tpu_custom_call.1} parent=87 // pred_check_branch
          %1254 = sbr.rel (%p1252) target = $region92
        $region91: #{tpu_custom_call.1} parent=87 // pred_region
          %s1255 = sand.u32 %s341, 1
          %s1256 = scalar_lea.sflag [#allocation3], %s1255
          %s1257 = sand.u32 %s341, 1
          %s1258 = smul.addr %s1257, 4
          %s1259 = scalar_lea.vmem [#allocation2], %s1258
          %1260 = dma.done %s1256, 64
        $region92: #{tpu_custom_call.1} parent=87 // pred_fallthru
          _
        // Predicated region
        $region93: #{tpu_custom_call.1} parent=87 // pred_check
          %p1261 = pneg %p382
        $region94: #{tpu_custom_call.1} parent=87 // pred_check_branch
          %1263 = sbr.rel (%p1261) target = $region96
        $region95: #{tpu_custom_call.1} parent=87 // pred_region
          %s1264 = sand.u32 %s367, 1
          %s1265 = scalar_lea.sflag [#allocation5], %s1264
          %s1266 = sand.u32 %s367, 1
          %s1267 = smul.addr %s1266, 8
          %s1268 = scalar_lea.vmem [#allocation4], %s1267
          %1269 = dma.done %s1265, 128
        $region96: #{tpu_custom_call.1} parent=87 // pred_fallthru
          _
      $region88: #{tpu_custom_call.1} parent=5 // pred_fallthru
        _
    $region6: #{tpu_custom_call.1} parent=1 // loop_footer
      %s32 = sadd.s32 1, %s28
    $region7: #{tpu_custom_call.1} parent=1 // loop_footer_branch
      %27 = sbr.rel target = $region3
    $region8: #{tpu_custom_call.1} parent=1 // loop_exit
      _
    %1270 = vsyncpa [#allocation3], 1
    %s1271 = scalar_lea.sflag [#allocation3], 1
    %1272 = vsyncpa %s1271, 1
    %1273 = vsyncpa [#allocation5], 1
    %s1274 = scalar_lea.sflag [#allocation5], 1
    %1275 = vsyncpa %s1274, 1

</llo_original>
